<compile_context>
chip_gen: v7x
topology: tpu7x:2x2x1
jax: 0.10.0
libtpu: 0.0.40
codegen_flags: <defaults>
</compile_context>

<pallas_src>
import functools

import jax
import jax.numpy as jnp
from jax import lax
from jax.experimental import pallas as pl
from jax.experimental.pallas import tpu as pltpu

BN_EPS = 1e-5
LEAKY_SLOPE = 0.01          # PyTorch nn.LeakyReLU default negative_slope


def _round_up(x, m):
    return (x + m - 1) // m * m


def _vmem_limit_bytes():
    """Per-generation VMEM limit: leave headroom below physical capacity, cap at 100 MiB."""
    try:
        cap = pltpu.get_tpu_info().vmem_capacity_bytes
    except Exception:
        cap = 64 * 1024 * 1024          # conservative fallback (v7x physical VMEM)
    return int(max(32 * 1024 * 1024, min(cap - 16 * 1024 * 1024, 100 * 1024 * 1024)))


@functools.partial(jax.jit, static_argnames=("stride", "padding", "compute_dtype"))
def conv_forward(x, weight, gamma, beta, *, stride=1, padding=0,
                 compute_dtype=jnp.bfloat16):
    """Forward of the PyTorch `Conv` block.

    x:      (N, Cin, H, W)        float32, NCHW
    weight: (Cout, Cin, kh, kw)   float32 (Conv2d weight, no bias)
    gamma:  (Cout,)               BatchNorm2d weight
    beta:   (Cout,)               BatchNorm2d bias
    returns (N, Cout, Ho, Wo)     NCHW, float32
    """
    N, Cin, H, W = x.shape
    Cout, _, kh, kw = weight.shape

    itemsize = jnp.dtype(compute_dtype).itemsize
    packing = 8 * (4 // itemsize)                 # sublane packing: 8 (f32) / 16 (bf16)
    Hp, Wp = H + 2 * padding, W + 2 * padding
    Ho = (Hp - kh) // stride + 1
    Wo = (Wp - kw) // stride + 1
    Cin_p = _round_up(Cin, packing)               # aligned contraction dim
    Cp = _round_up(Cout, 128) if Cout <= 128 else _round_up(Cout, 256)  # lane-dense / MXU-N

    # ---- Layout prep (single cast + pad; no im2col buffer) --------------------------------
    # NCHW -> padded NHWC in compute dtype.  Zero-padded channels/halo contribute nothing.
    xp = jnp.pad(x.astype(compute_dtype).transpose(0, 2, 3, 1),
                 ((0, 0), (padding, padding), (padding, padding), (0, Cin_p - Cin)))
    # (Cout, Cin, kh, kw) -> (kh*kw, Cin_p, Cp)
    wk = jnp.pad(weight.transpose(2, 3, 1, 0).reshape(kh * kw, Cin, Cout),
                 ((0, 0), (0, Cin_p - Cin), (0, Cp - Cout))).astype(compute_dtype)

    # ---- In-kernel im2col conv for one output row (shared by both passes) -----------------
    def _conv_row(x_row_refs, w_ref):
        acc = None
        for i in range(kh):
            xi = x_row_refs[i][...].reshape(Wp, Cin_p)        # padded input row ho*stride + i
            for j in range(kw):
                # stride>1 uses a static strided slice; stride==1 is a plain contiguous slice.
                lhs = xi[j: j + (Wo - 1) * stride + 1: stride, :]          # (Wo, Cin_p)
                part = jnp.dot(lhs, w_ref[i * kw + j],
                               preferred_element_type=jnp.float32)         # (Wo, Cp) f32
                acc = part if acc is None else acc + part
        return acc

    # Pass 1: stats only (no conv intermediate is written to HBM).
    def _stats_kernel(*refs):
        x_rows, w_ref, stats_ref = refs[:kh], refs[kh], refs[kh + 1]
        y = _conv_row(x_rows, w_ref)
        s = jnp.sum(y, axis=0, keepdims=True)
        sq = jnp.sum(y * y, axis=0, keepdims=True)
        stats_ref[...] = jnp.concatenate([s, sq], axis=0).reshape(1, 1, 2, Cp)

    # Pass 2: recompute conv, fuse BN affine (precomputed scale/shift) + LeakyReLU.
    def _apply_kernel(*refs):
        x_rows, w_ref = refs[:kh], refs[kh]
        scale_ref, shift_ref, out_ref = refs[kh + 1], refs[kh + 2], refs[kh + 3]
        y = _conv_row(x_rows, w_ref)
        z = y * scale_ref[...] + shift_ref[...]
        out_ref[...] = jnp.where(z >= 0, z, LEAKY_SLOPE * z).reshape(1, 1, Wo, Cp)

    # ---- BlockSpecs ------------------------------------------------------------------------
    def _row_spec(i):
        # h-block size 1 => block index == element row index; kh shifted views give in-kernel
        # im2col without overlapping-block issues.
        return pl.BlockSpec((1, 1, Wp, Cin_p),
                            lambda n, h, i=i: (n, h * stride + i, 0, 0))

    x_specs = [_row_spec(i) for i in range(kh)]
    w_spec = pl.BlockSpec((kh * kw, Cin_p, Cp), lambda n, h: (0, 0, 0))   # resident weight
    vec_spec = pl.BlockSpec((1, Cp), lambda n, h: (0, 0))

    cparams = pltpu.CompilerParams(dimension_semantics=("parallel", "parallel"),
                                   vmem_limit_bytes=_vmem_limit_bytes())

    flops = 2 * N * Ho * Wo * kh * kw * Cin_p * Cp
    x_bytes = N * Ho * kh * Wp * Cin_p * itemsize
    w_bytes = kh * kw * Cin_p * Cp * itemsize

    # ------------------------------ Pass 1: BN partial statistics --------------------------
    stats = pl.pallas_call(
        _stats_kernel,
        grid=(N, Ho),
        in_specs=x_specs + [w_spec],
        out_specs=pl.BlockSpec((1, 1, 2, Cp), lambda n, h: (n, h, 0, 0)),
        out_shape=jax.ShapeDtypeStruct((N, Ho, 2, Cp), jnp.float32),
        compiler_params=cparams,
        cost_estimate=pl.CostEstimate(flops=flops, transcendentals=0,
                                      bytes_accessed=x_bytes + w_bytes + N * Ho * 2 * Cp * 4),
    )(*([xp] * kh), wk)

    # -------------- Tiny glue: reduce partials, fold BN into per-channel scale/shift --------
    tot = jnp.sum(stats, axis=(0, 1))                  # (2, Cp)
    s_sum = tot[0, :Cout]
    sq_sum = tot[1, :Cout]
    m = jnp.float32(N * Ho * Wo)                       # true element count per channel
    mean = s_sum / m
    var = jnp.maximum(sq_sum / m - mean * mean, 0.0)   # biased var, matches BN train mode
    inv_std = lax.rsqrt(var + BN_EPS)
    scale = gamma * inv_std
    shift = beta - mean * scale
    scale_p = jnp.pad(scale.astype(jnp.float32), (0, Cp - Cout)).reshape(1, Cp)
    shift_p = jnp.pad(shift.astype(jnp.float32), (0, Cp - Cout)).reshape(1, Cp)

    # ------------------------- Pass 2: conv recompute + BN + LeakyReLU ----------------------
    out_nhwc = pl.pallas_call(
        _apply_kernel,
        grid=(N, Ho),
        in_specs=x_specs + [w_spec, vec_spec, vec_spec],
        out_specs=pl.BlockSpec((1, 1, Wo, Cp), lambda n, h: (n, h, 0, 0)),
        out_shape=jax.ShapeDtypeStruct((N, Ho, Wo, Cp), jnp.float32),
        compiler_params=cparams,
        cost_estimate=pl.CostEstimate(flops=flops + 3 * N * Ho * Wo * Cp, transcendentals=0,
                                      bytes_accessed=x_bytes + w_bytes
                                      + N * Ho * Wo * Cp * 4 + 2 * Cp * 4),
    )(*([xp] * kh), wk, scale_p, shift_p)

    # Channel unpad + NHWC -> NCHW only to match the PyTorch interface (see TODO above).
    return out_nhwc[..., :Cout].transpose(0, 3, 1, 2)


def _reference(x, weight, gamma, beta, stride, padding):
    # Pure-JAX reference (f32) for correctness checking.
    y = lax.conv_general_dilated(
        x, weight, window_strides=(stride, stride),
        padding=[(padding, padding), (padding, padding)],
        dimension_numbers=("NCHW", "OIHW", "NCHW"))
    mean = jnp.mean(y, axis=(0, 2, 3), keepdims=True)
    var = jnp.mean((y - mean) ** 2, axis=(0, 2, 3), keepdims=True)
    z = (y - mean) * lax.rsqrt(var + BN_EPS)
    z = z * gamma.reshape(1, -1, 1, 1) + beta.reshape(1, -1, 1, 1)
    return jnp.where(z >= 0, z, LEAKY_SLOPE * z)


if __name__ == "__main__":
    # Module config (synthetic, deterministic init).
    in_channels, out_channels = 4, 8
    kernel_size, stride, padding = 3, 1, 1
    N, H, W = 2, 16, 16

    key = jax.random.PRNGKey(0)
    kx, kw_key = jax.random.split(key)
    x = jax.random.normal(kx, (N, in_channels, H, W), dtype=jnp.float32)
    weight = 0.1 * jax.random.normal(
        kw_key, (out_channels, in_channels, kernel_size, kernel_size), dtype=jnp.float32)
    # PyTorch BatchNorm2d default init: weight=1, bias=0.
    gamma = jnp.ones((out_channels,), dtype=jnp.float32)
    beta = jnp.zeros((out_channels,), dtype=jnp.float32)

    ref = _reference(x, weight, gamma, beta, stride, padding)

    # f32 compute path: tight check of the kernel structure.
    out_f32 = conv_forward(x, weight, gamma, beta, stride=stride, padding=padding,
                           compute_dtype=jnp.float32)
    out_f32 = jax.block_until_ready(out_f32)
    assert out_f32.shape == ref.shape
    assert jnp.allclose(out_f32, ref, atol=1e-3, rtol=1e-3)

    # Default bf16 MXU path: looser tolerance for bf16 input/weight rounding.
    out_bf16 = conv_forward(x, weight, gamma, beta, stride=stride, padding=padding)
    out_bf16 = jax.block_until_ready(out_bf16)
    assert out_bf16.shape == ref.shape
    assert jnp.allclose(out_bf16, ref, atol=5e-2, rtol=5e-2)

    print("KERNEL_OK")
</pallas_src>

<mosaic_0001>
module attributes {stable_mosaic.version = 11 : i64} {
  func.func @_stats_kernel(%arg0: i32, %arg1: i32, %arg2: memref<1x1x18x8xf32, #tpu.memory_space<vmem>>, %arg3: memref<1x1x18x8xf32, #tpu.memory_space<vmem>>, %arg4: memref<1x1x18x8xf32, #tpu.memory_space<vmem>>, %arg5: memref<9x8x128xf32, #tpu.memory_space<vmem>>, %arg6: memref<1x1x2x128xf32, #tpu.memory_space<vmem>>) attributes {dimension_semantics = [#tpu.dimension_semantics<parallel>, #tpu.dimension_semantics<parallel>], iteration_bounds = array<i64: 2, 16>, scalar_prefetch = 0 : i64, scratch_operands = 0 : i64, tpu.core_type = #tpu.core_type<tc>, window_params = [{transform_indices = @transform_0, window_bounds = array<i64: 1, 1, 18, 8>}, {transform_indices = @transform_1, window_bounds = array<i64: 1, 1, 18, 8>}, {transform_indices = @transform_2, window_bounds = array<i64: 1, 1, 18, 8>}, {pipeline_mode = #tpu.pipeline_mode<synchronous>, transform_indices = @transform_3, window_bounds = array<i64: 9, 8, 128>}, {transform_indices = @transform_4, window_bounds = array<i64: 1, 1, 2, 128>}]} {
    %c0 = arith.constant 0 : index
    %c0_0 = arith.constant 0 : index
    %c0_1 = arith.constant 0 : index
    %c0_2 = arith.constant 0 : index
    %0 = vector.load %arg2[%c0, %c0_0, %c0_1, %c0_2] : memref<1x1x18x8xf32, #tpu.memory_space<vmem>>, vector<1x1x18x8xf32>
    %1 = vector.shape_cast %0 : vector<1x1x18x8xf32> to vector<18x8xf32>
    %2 = vector.extract_strided_slice %1 {offsets = [0, 0], sizes = [16, 8], strides = [1, 1]} : vector<18x8xf32> to vector<16x8xf32>
    %c0_3 = arith.constant 0 : index
    %c0_4 = arith.constant 0 : index
    %c0_5 = arith.constant 0 : index
    %3 = vector.load %arg5[%c0_3, %c0_4, %c0_5] : memref<9x8x128xf32, #tpu.memory_space<vmem>>, vector<1x8x128xf32>
    %4 = vector.shape_cast %3 : vector<1x8x128xf32> to vector<8x128xf32>
    %cst = arith.constant dense<0.000000e+00> : vector<16x128xf32>
    %5 = tpu.matmul %2, %4, %cst {dimension_numbers = #tpu.dot_dimension_numbers<[1], [0], [0], [1], [0, 0, 1, 1], [], []>} : vector<16x8xf32>, vector<8x128xf32>, vector<16x128xf32> -> vector<16x128xf32>
    %6 = vector.extract_strided_slice %1 {offsets = [1, 0], sizes = [16, 8], strides = [1, 1]} : vector<18x8xf32> to vector<16x8xf32>
    %c1 = arith.constant 1 : index
    %c0_6 = arith.constant 0 : index
    %c0_7 = arith.constant 0 : index
    %7 = vector.load %arg5[%c1, %c0_6, %c0_7] : memref<9x8x128xf32, #tpu.memory_space<vmem>>, vector<1x8x128xf32>
    %8 = vector.shape_cast %7 : vector<1x8x128xf32> to vector<8x128xf32>
    %cst_8 = arith.constant dense<0.000000e+00> : vector<16x128xf32>
    %9 = tpu.matmul %6, %8, %cst_8 {dimension_numbers = #tpu.dot_dimension_numbers<[1], [0], [0], [1], [0, 0, 1, 1], [], []>} : vector<16x8xf32>, vector<8x128xf32>, vector<16x128xf32> -> vector<16x128xf32>
    %10 = arith.addf %5, %9 : vector<16x128xf32>
    %11 = vector.extract_strided_slice %1 {offsets = [2, 0], sizes = [16, 8], strides = [1, 1]} : vector<18x8xf32> to vector<16x8xf32>
    %c2 = arith.constant 2 : index
    %c0_9 = arith.constant 0 : index
    %c0_10 = arith.constant 0 : index
    %12 = vector.load %arg5[%c2, %c0_9, %c0_10] : memref<9x8x128xf32, #tpu.memory_space<vmem>>, vector<1x8x128xf32>
    %13 = vector.shape_cast %12 : vector<1x8x128xf32> to vector<8x128xf32>
    %cst_11 = arith.constant dense<0.000000e+00> : vector<16x128xf32>
    %14 = tpu.matmul %11, %13, %cst_11 {dimension_numbers = #tpu.dot_dimension_numbers<[1], [0], [0], [1], [0, 0, 1, 1], [], []>} : vector<16x8xf32>, vector<8x128xf32>, vector<16x128xf32> -> vector<16x128xf32>
    %15 = arith.addf %10, %14 : vector<16x128xf32>
    %c0_12 = arith.constant 0 : index
    %c0_13 = arith.constant 0 : index
    %c0_14 = arith.constant 0 : index
    %c0_15 = arith.constant 0 : index
    %16 = vector.load %arg3[%c0_12, %c0_13, %c0_14, %c0_15] : memref<1x1x18x8xf32, #tpu.memory_space<vmem>>, vector<1x1x18x8xf32>
    %17 = vector.shape_cast %16 : vector<1x1x18x8xf32> to vector<18x8xf32>
    %18 = vector.extract_strided_slice %17 {offsets = [0, 0], sizes = [16, 8], strides = [1, 1]} : vector<18x8xf32> to vector<16x8xf32>
    %c3 = arith.constant 3 : index
    %c0_16 = arith.constant 0 : index
    %c0_17 = arith.constant 0 : index
    %19 = vector.load %arg5[%c3, %c0_16, %c0_17] : memref<9x8x128xf32, #tpu.memory_space<vmem>>, vector<1x8x128xf32>
    %20 = vector.shape_cast %19 : vector<1x8x128xf32> to vector<8x128xf32>
    %cst_18 = arith.constant dense<0.000000e+00> : vector<16x128xf32>
    %21 = tpu.matmul %18, %20, %cst_18 {dimension_numbers = #tpu.dot_dimension_numbers<[1], [0], [0], [1], [0, 0, 1, 1], [], []>} : vector<16x8xf32>, vector<8x128xf32>, vector<16x128xf32> -> vector<16x128xf32>
    %22 = arith.addf %15, %21 : vector<16x128xf32>
    %23 = vector.extract_strided_slice %17 {offsets = [1, 0], sizes = [16, 8], strides = [1, 1]} : vector<18x8xf32> to vector<16x8xf32>
    %c4 = arith.constant 4 : index
    %c0_19 = arith.constant 0 : index
    %c0_20 = arith.constant 0 : index
    %24 = vector.load %arg5[%c4, %c0_19, %c0_20] : memref<9x8x128xf32, #tpu.memory_space<vmem>>, vector<1x8x128xf32>
    %25 = vector.shape_cast %24 : vector<1x8x128xf32> to vector<8x128xf32>
    %cst_21 = arith.constant dense<0.000000e+00> : vector<16x128xf32>
    %26 = tpu.matmul %23, %25, %cst_21 {dimension_numbers = #tpu.dot_dimension_numbers<[1], [0], [0], [1], [0, 0, 1, 1], [], []>} : vector<16x8xf32>, vector<8x128xf32>, vector<16x128xf32> -> vector<16x128xf32>
    %27 = arith.addf %22, %26 : vector<16x128xf32>
    %28 = vector.extract_strided_slice %17 {offsets = [2, 0], sizes = [16, 8], strides = [1, 1]} : vector<18x8xf32> to vector<16x8xf32>
    %c5 = arith.constant 5 : index
    %c0_22 = arith.constant 0 : index
    %c0_23 = arith.constant 0 : index
    %29 = vector.load %arg5[%c5, %c0_22, %c0_23] : memref<9x8x128xf32, #tpu.memory_space<vmem>>, vector<1x8x128xf32>
    %30 = vector.shape_cast %29 : vector<1x8x128xf32> to vector<8x128xf32>
    %cst_24 = arith.constant dense<0.000000e+00> : vector<16x128xf32>
    %31 = tpu.matmul %28, %30, %cst_24 {dimension_numbers = #tpu.dot_dimension_numbers<[1], [0], [0], [1], [0, 0, 1, 1], [], []>} : vector<16x8xf32>, vector<8x128xf32>, vector<16x128xf32> -> vector<16x128xf32>
    %32 = arith.addf %27, %31 : vector<16x128xf32>
    %c0_25 = arith.constant 0 : index
    %c0_26 = arith.constant 0 : index
    %c0_27 = arith.constant 0 : index
    %c0_28 = arith.constant 0 : index
    %33 = vector.load %arg4[%c0_25, %c0_26, %c0_27, %c0_28] : memref<1x1x18x8xf32, #tpu.memory_space<vmem>>, vector<1x1x18x8xf32>
    %34 = vector.shape_cast %33 : vector<1x1x18x8xf32> to vector<18x8xf32>
    %35 = vector.extract_strided_slice %34 {offsets = [0, 0], sizes = [16, 8], strides = [1, 1]} : vector<18x8xf32> to vector<16x8xf32>
    %c6 = arith.constant 6 : index
    %c0_29 = arith.constant 0 : index
    %c0_30 = arith.constant 0 : index
    %36 = vector.load %arg5[%c6, %c0_29, %c0_30] : memref<9x8x128xf32, #tpu.memory_space<vmem>>, vector<1x8x128xf32>
    %37 = vector.shape_cast %36 : vector<1x8x128xf32> to vector<8x128xf32>
    %cst_31 = arith.constant dense<0.000000e+00> : vector<16x128xf32>
    %38 = tpu.matmul %35, %37, %cst_31 {dimension_numbers = #tpu.dot_dimension_numbers<[1], [0], [0], [1], [0, 0, 1, 1], [], []>} : vector<16x8xf32>, vector<8x128xf32>, vector<16x128xf32> -> vector<16x128xf32>
    %39 = arith.addf %32, %38 : vector<16x128xf32>
    %40 = vector.extract_strided_slice %34 {offsets = [1, 0], sizes = [16, 8], strides = [1, 1]} : vector<18x8xf32> to vector<16x8xf32>
    %c7 = arith.constant 7 : index
    %c0_32 = arith.constant 0 : index
    %c0_33 = arith.constant 0 : index
    %41 = vector.load %arg5[%c7, %c0_32, %c0_33] : memref<9x8x128xf32, #tpu.memory_space<vmem>>, vector<1x8x128xf32>
    %42 = vector.shape_cast %41 : vector<1x8x128xf32> to vector<8x128xf32>
    %cst_34 = arith.constant dense<0.000000e+00> : vector<16x128xf32>
    %43 = tpu.matmul %40, %42, %cst_34 {dimension_numbers = #tpu.dot_dimension_numbers<[1], [0], [0], [1], [0, 0, 1, 1], [], []>} : vector<16x8xf32>, vector<8x128xf32>, vector<16x128xf32> -> vector<16x128xf32>
    %44 = arith.addf %39, %43 : vector<16x128xf32>
    %45 = vector.extract_strided_slice %34 {offsets = [2, 0], sizes = [16, 8], strides = [1, 1]} : vector<18x8xf32> to vector<16x8xf32>
    %c8 = arith.constant 8 : index
    %c0_35 = arith.constant 0 : index
    %c0_36 = arith.constant 0 : index
    %46 = vector.load %arg5[%c8, %c0_35, %c0_36] : memref<9x8x128xf32, #tpu.memory_space<vmem>>, vector<1x8x128xf32>
    %47 = vector.shape_cast %46 : vector<1x8x128xf32> to vector<8x128xf32>
    %cst_37 = arith.constant dense<0.000000e+00> : vector<16x128xf32>
    %48 = tpu.matmul %45, %47, %cst_37 {dimension_numbers = #tpu.dot_dimension_numbers<[1], [0], [0], [1], [0, 0, 1, 1], [], []>} : vector<16x8xf32>, vector<8x128xf32>, vector<16x128xf32> -> vector<16x128xf32>
    %49 = arith.addf %44, %48 : vector<16x128xf32>
    %cst_38 = arith.constant dense<0.000000e+00> : vector<128xf32>
    %50 = vector.multi_reduction <add>, %49, %cst_38 [0] : vector<16x128xf32> to vector<128xf32>
    %51 = vector.shape_cast %50 : vector<128xf32> to vector<1x128xf32>
    %52 = arith.mulf %49, %49 : vector<16x128xf32>
    %cst_39 = arith.constant dense<0.000000e+00> : vector<128xf32>
    %53 = vector.multi_reduction <add>, %52, %cst_39 [0] : vector<16x128xf32> to vector<128xf32>
    %54 = vector.shape_cast %53 : vector<128xf32> to vector<1x128xf32>
    %55 = tpu.concatenate %51, %54 in 0 : vector<1x128xf32>, vector<1x128xf32> -> vector<2x128xf32>
    %56 = vector.shape_cast %55 : vector<2x128xf32> to vector<1x1x2x128xf32>
    %c0_40 = arith.constant 0 : index
    %c0_41 = arith.constant 0 : index
    %c0_42 = arith.constant 0 : index
    %c0_43 = arith.constant 0 : index
    %57 = vector.load %arg6[%c0_40, %c0_41, %c0_42, %c0_43] : memref<1x1x2x128xf32, #tpu.memory_space<vmem>>, vector<1x1x2x128xf32>
    tpu.vector_store %arg6[%c0_40, %c0_41, %c0_42, %c0_43], %56 {strides = array<i32>} : memref<1x1x2x128xf32, #tpu.memory_space<vmem>>, vector<1x1x2x128xf32>,
    return
  }
  func.func @transform_0(%arg0: i32, %arg1: i32) -> (i32, i32, i32, i32) {
    %c1_i32 = arith.constant 1 : i32
    %0 = arith.muli %arg1, %c1_i32 : i32
    %c0_i32 = arith.constant 0 : i32
    %1 = arith.addi %0, %c0_i32 : i32
    %c0_i32_0 = arith.constant 0 : i32
    %c0_i32_1 = arith.constant 0 : i32
    %c0_i32_2 = arith.constant 0 : i32
    return %arg0, %1, %c0_i32_0, %c0_i32_1 : i32, i32, i32, i32
  }
  func.func @transform_1(%arg0: i32, %arg1: i32) -> (i32, i32, i32, i32) {
    %c1_i32 = arith.constant 1 : i32
    %0 = arith.muli %arg1, %c1_i32 : i32
    %c1_i32_0 = arith.constant 1 : i32
    %1 = arith.addi %0, %c1_i32_0 : i32
    %c0_i32 = arith.constant 0 : i32
    %c0_i32_1 = arith.constant 0 : i32
    %c0_i32_2 = arith.constant 0 : i32
    return %arg0, %1, %c0_i32, %c0_i32_1 : i32, i32, i32, i32
  }
  func.func @transform_2(%arg0: i32, %arg1: i32) -> (i32, i32, i32, i32) {
    %c1_i32 = arith.constant 1 : i32
    %0 = arith.muli %arg1, %c1_i32 : i32
    %c2_i32 = arith.constant 2 : i32
    %1 = arith.addi %0, %c2_i32 : i32
    %c0_i32 = arith.constant 0 : i32
    %c0_i32_0 = arith.constant 0 : i32
    %c0_i32_1 = arith.constant 0 : i32
    return %arg0, %1, %c0_i32, %c0_i32_0 : i32, i32, i32, i32
  }
  func.func @transform_3(%arg0: i32, %arg1: i32) -> (i32, i32, i32) {
    %c0_i32 = arith.constant 0 : i32
    %c0_i32_0 = arith.constant 0 : i32
    %c0_i32_1 = arith.constant 0 : i32
    %c0_i32_2 = arith.constant 0 : i32
    return %c0_i32, %c0_i32_0, %c0_i32_1 : i32, i32, i32
  }
  func.func @transform_4(%arg0: i32, %arg1: i32) -> (i32, i32, i32, i32) {
    %c0_i32 = arith.constant 0 : i32
    %c0_i32_0 = arith.constant 0 : i32
    %c0_i32_1 = arith.constant 0 : i32
    return %arg0, %arg1, %c0_i32, %c0_i32_0 : i32, i32, i32, i32
  }
}

module attributes {stable_mosaic.version = 11 : i64} {
  func.func @_apply_kernel(%arg0: i32, %arg1: i32, %arg2: memref<1x1x18x8xf32, #tpu.memory_space<vmem>>, %arg3: memref<1x1x18x8xf32, #tpu.memory_space<vmem>>, %arg4: memref<1x1x18x8xf32, #tpu.memory_space<vmem>>, %arg5: memref<9x8x128xf32, #tpu.memory_space<vmem>>, %arg6: memref<1x128xf32, #tpu.memory_space<vmem>>, %arg7: memref<1x128xf32, #tpu.memory_space<vmem>>, %arg8: memref<1x1x16x128xf32, #tpu.memory_space<vmem>>) attributes {dimension_semantics = [#tpu.dimension_semantics<parallel>, #tpu.dimension_semantics<parallel>], iteration_bounds = array<i64: 2, 16>, scalar_prefetch = 0 : i64, scratch_operands = 0 : i64, tpu.core_type = #tpu.core_type<tc>, window_params = [{transform_indices = @transform_0, window_bounds = array<i64: 1, 1, 18, 8>}, {transform_indices = @transform_1, window_bounds = array<i64: 1, 1, 18, 8>}, {transform_indices = @transform_2, window_bounds = array<i64: 1, 1, 18, 8>}, {pipeline_mode = #tpu.pipeline_mode<synchronous>, transform_indices = @transform_3, window_bounds = array<i64: 9, 8, 128>}, {pipeline_mode = #tpu.pipeline_mode<synchronous>, transform_indices = @transform_4, window_bounds = array<i64: 1, 128>}, {pipeline_mode = #tpu.pipeline_mode<synchronous>, transform_indices = @transform_5, window_bounds = array<i64: 1, 128>}, {transform_indices = @transform_6, window_bounds = array<i64: 1, 1, 16, 128>}]} {
    %c0 = arith.constant 0 : index
    %c0_0 = arith.constant 0 : index
    %c0_1 = arith.constant 0 : index
    %c0_2 = arith.constant 0 : index
    %0 = vector.load %arg2[%c0, %c0_0, %c0_1, %c0_2] : memref<1x1x18x8xf32, #tpu.memory_space<vmem>>, vector<1x1x18x8xf32>
    %1 = vector.shape_cast %0 : vector<1x1x18x8xf32> to vector<18x8xf32>
    %2 = vector.extract_strided_slice %1 {offsets = [0, 0], sizes = [16, 8], strides = [1, 1]} : vector<18x8xf32> to vector<16x8xf32>
    %c0_3 = arith.constant 0 : index
    %c0_4 = arith.constant 0 : index
    %c0_5 = arith.constant 0 : index
    %3 = vector.load %arg5[%c0_3, %c0_4, %c0_5] : memref<9x8x128xf32, #tpu.memory_space<vmem>>, vector<1x8x128xf32>
    %4 = vector.shape_cast %3 : vector<1x8x128xf32> to vector<8x128xf32>
    %cst = arith.constant dense<0.000000e+00> : vector<16x128xf32>
    %5 = tpu.matmul %2, %4, %cst {dimension_numbers = #tpu.dot_dimension_numbers<[1], [0], [0], [1], [0, 0, 1, 1], [], []>} : vector<16x8xf32>, vector<8x128xf32>, vector<16x128xf32> -> vector<16x128xf32>
    %6 = vector.extract_strided_slice %1 {offsets = [1, 0], sizes = [16, 8], strides = [1, 1]} : vector<18x8xf32> to vector<16x8xf32>
    %c1 = arith.constant 1 : index
    %c0_6 = arith.constant 0 : index
    %c0_7 = arith.constant 0 : index
    %7 = vector.load %arg5[%c1, %c0_6, %c0_7] : memref<9x8x128xf32, #tpu.memory_space<vmem>>, vector<1x8x128xf32>
    %8 = vector.shape_cast %7 : vector<1x8x128xf32> to vector<8x128xf32>
    %cst_8 = arith.constant dense<0.000000e+00> : vector<16x128xf32>
    %9 = tpu.matmul %6, %8, %cst_8 {dimension_numbers = #tpu.dot_dimension_numbers<[1], [0], [0], [1], [0, 0, 1, 1], [], []>} : vector<16x8xf32>, vector<8x128xf32>, vector<16x128xf32> -> vector<16x128xf32>
    %10 = arith.addf %5, %9 : vector<16x128xf32>
    %11 = vector.extract_strided_slice %1 {offsets = [2, 0], sizes = [16, 8], strides = [1, 1]} : vector<18x8xf32> to vector<16x8xf32>
    %c2 = arith.constant 2 : index
    %c0_9 = arith.constant 0 : index
    %c0_10 = arith.constant 0 : index
    %12 = vector.load %arg5[%c2, %c0_9, %c0_10] : memref<9x8x128xf32, #tpu.memory_space<vmem>>, vector<1x8x128xf32>
    %13 = vector.shape_cast %12 : vector<1x8x128xf32> to vector<8x128xf32>
    %cst_11 = arith.constant dense<0.000000e+00> : vector<16x128xf32>
    %14 = tpu.matmul %11, %13, %cst_11 {dimension_numbers = #tpu.dot_dimension_numbers<[1], [0], [0], [1], [0, 0, 1, 1], [], []>} : vector<16x8xf32>, vector<8x128xf32>, vector<16x128xf32> -> vector<16x128xf32>
    %15 = arith.addf %10, %14 : vector<16x128xf32>
    %c0_12 = arith.constant 0 : index
    %c0_13 = arith.constant 0 : index
    %c0_14 = arith.constant 0 : index
    %c0_15 = arith.constant 0 : index
    %16 = vector.load %arg3[%c0_12, %c0_13, %c0_14, %c0_15] : memref<1x1x18x8xf32, #tpu.memory_space<vmem>>, vector<1x1x18x8xf32>
    %17 = vector.shape_cast %16 : vector<1x1x18x8xf32> to vector<18x8xf32>
    %18 = vector.extract_strided_slice %17 {offsets = [0, 0], sizes = [16, 8], strides = [1, 1]} : vector<18x8xf32> to vector<16x8xf32>
    %c3 = arith.constant 3 : index
    %c0_16 = arith.constant 0 : index
    %c0_17 = arith.constant 0 : index
    %19 = vector.load %arg5[%c3, %c0_16, %c0_17] : memref<9x8x128xf32, #tpu.memory_space<vmem>>, vector<1x8x128xf32>
    %20 = vector.shape_cast %19 : vector<1x8x128xf32> to vector<8x128xf32>
    %cst_18 = arith.constant dense<0.000000e+00> : vector<16x128xf32>
    %21 = tpu.matmul %18, %20, %cst_18 {dimension_numbers = #tpu.dot_dimension_numbers<[1], [0], [0], [1], [0, 0, 1, 1], [], []>} : vector<16x8xf32>, vector<8x128xf32>, vector<16x128xf32> -> vector<16x128xf32>
    %22 = arith.addf %15, %21 : vector<16x128xf32>
    %23 = vector.extract_strided_slice %17 {offsets = [1, 0], sizes = [16, 8], strides = [1, 1]} : vector<18x8xf32> to vector<16x8xf32>
    %c4 = arith.constant 4 : index
    %c0_19 = arith.constant 0 : index
    %c0_20 = arith.constant 0 : index
    %24 = vector.load %arg5[%c4, %c0_19, %c0_20] : memref<9x8x128xf32, #tpu.memory_space<vmem>>, vector<1x8x128xf32>
    %25 = vector.shape_cast %24 : vector<1x8x128xf32> to vector<8x128xf32>
    %cst_21 = arith.constant dense<0.000000e+00> : vector<16x128xf32>
    %26 = tpu.matmul %23, %25, %cst_21 {dimension_numbers = #tpu.dot_dimension_numbers<[1], [0], [0], [1], [0, 0, 1, 1], [], []>} : vector<16x8xf32>, vector<8x128xf32>, vector<16x128xf32> -> vector<16x128xf32>
    %27 = arith.addf %22, %26 : vector<16x128xf32>
    %28 = vector.extract_strided_slice %17 {offsets = [2, 0], sizes = [16, 8], strides = [1, 1]} : vector<18x8xf32> to vector<16x8xf32>
    %c5 = arith.constant 5 : index
    %c0_22 = arith.constant 0 : index
    %c0_23 = arith.constant 0 : index
    %29 = vector.load %arg5[%c5, %c0_22, %c0_23] : memref<9x8x128xf32, #tpu.memory_space<vmem>>, vector<1x8x128xf32>
    %30 = vector.shape_cast %29 : vector<1x8x128xf32> to vector<8x128xf32>
    %cst_24 = arith.constant dense<0.000000e+00> : vector<16x128xf32>
    %31 = tpu.matmul %28, %30, %cst_24 {dimension_numbers = #tpu.dot_dimension_numbers<[1], [0], [0], [1], [0, 0, 1, 1], [], []>} : vector<16x8xf32>, vector<8x128xf32>, vector<16x128xf32> -> vector<16x128xf32>
    %32 = arith.addf %27, %31 : vector<16x128xf32>
    %c0_25 = arith.constant 0 : index
    %c0_26 = arith.constant 0 : index
    %c0_27 = arith.constant 0 : index
    %c0_28 = arith.constant 0 : index
    %33 = vector.load %arg4[%c0_25, %c0_26, %c0_27, %c0_28] : memref<1x1x18x8xf32, #tpu.memory_space<vmem>>, vector<1x1x18x8xf32>
    %34 = vector.shape_cast %33 : vector<1x1x18x8xf32> to vector<18x8xf32>
    %35 = vector.extract_strided_slice %34 {offsets = [0, 0], sizes = [16, 8], strides = [1, 1]} : vector<18x8xf32> to vector<16x8xf32>
    %c6 = arith.constant 6 : index
    %c0_29 = arith.constant 0 : index
    %c0_30 = arith.constant 0 : index
    %36 = vector.load %arg5[%c6, %c0_29, %c0_30] : memref<9x8x128xf32, #tpu.memory_space<vmem>>, vector<1x8x128xf32>
    %37 = vector.shape_cast %36 : vector<1x8x128xf32> to vector<8x128xf32>
    %cst_31 = arith.constant dense<0.000000e+00> : vector<16x128xf32>
    %38 = tpu.matmul %35, %37, %cst_31 {dimension_numbers = #tpu.dot_dimension_numbers<[1], [0], [0], [1], [0, 0, 1, 1], [], []>} : vector<16x8xf32>, vector<8x128xf32>, vector<16x128xf32> -> vector<16x128xf32>
    %39 = arith.addf %32, %38 : vector<16x128xf32>
    %40 = vector.extract_strided_slice %34 {offsets = [1, 0], sizes = [16, 8], strides = [1, 1]} : vector<18x8xf32> to vector<16x8xf32>
    %c7 = arith.constant 7 : index
    %c0_32 = arith.constant 0 : index
    %c0_33 = arith.constant 0 : index
    %41 = vector.load %arg5[%c7, %c0_32, %c0_33] : memref<9x8x128xf32, #tpu.memory_space<vmem>>, vector<1x8x128xf32>
    %42 = vector.shape_cast %41 : vector<1x8x128xf32> to vector<8x128xf32>
    %cst_34 = arith.constant dense<0.000000e+00> : vector<16x128xf32>
    %43 = tpu.matmul %40, %42, %cst_34 {dimension_numbers = #tpu.dot_dimension_numbers<[1], [0], [0], [1], [0, 0, 1, 1], [], []>} : vector<16x8xf32>, vector<8x128xf32>, vector<16x128xf32> -> vector<16x128xf32>
    %44 = arith.addf %39, %43 : vector<16x128xf32>
    %45 = vector.extract_strided_slice %34 {offsets = [2, 0], sizes = [16, 8], strides = [1, 1]} : vector<18x8xf32> to vector<16x8xf32>
    %c8 = arith.constant 8 : index
    %c0_35 = arith.constant 0 : index
    %c0_36 = arith.constant 0 : index
    %46 = vector.load %arg5[%c8, %c0_35, %c0_36] : memref<9x8x128xf32, #tpu.memory_space<vmem>>, vector<1x8x128xf32>
    %47 = vector.shape_cast %46 : vector<1x8x128xf32> to vector<8x128xf32>
    %cst_37 = arith.constant dense<0.000000e+00> : vector<16x128xf32>
    %48 = tpu.matmul %45, %47, %cst_37 {dimension_numbers = #tpu.dot_dimension_numbers<[1], [0], [0], [1], [0, 0, 1, 1], [], []>} : vector<16x8xf32>, vector<8x128xf32>, vector<16x128xf32> -> vector<16x128xf32>
    %49 = arith.addf %44, %48 : vector<16x128xf32>
    %c0_38 = arith.constant 0 : index
    %c0_39 = arith.constant 0 : index
    %50 = vector.load %arg6[%c0_38, %c0_39] : memref<1x128xf32, #tpu.memory_space<vmem>>, vector<1x128xf32>
    %51 = vector.broadcast %50 : vector<1x128xf32> to vector<16x128xf32>
    %52 = arith.mulf %49, %51 : vector<16x128xf32>
    %c0_40 = arith.constant 0 : index
    %c0_41 = arith.constant 0 : index
    %53 = vector.load %arg7[%c0_40, %c0_41] : memref<1x128xf32, #tpu.memory_space<vmem>>, vector<1x128xf32>
    %54 = vector.broadcast %53 : vector<1x128xf32> to vector<16x128xf32>
    %55 = arith.addf %52, %54 : vector<16x128xf32>
    %cst_42 = arith.constant 0.000000e+00 : f32
    %56 = vector.broadcast %cst_42 : f32 to vector<16x128xf32>
    %57 = arith.cmpf oge, %55, %56 : vector<16x128xf32>
    %cst_43 = arith.constant 0.00999999977 : f32
    %58 = vector.broadcast %cst_43 : f32 to vector<16x128xf32>
    %59 = arith.mulf %58, %55 : vector<16x128xf32>
    %60 = arith.select %57, %55, %59 : vector<16x128xi1>, vector<16x128xf32>
    %61 = vector.shape_cast %60 : vector<16x128xf32> to vector<1x1x16x128xf32>
    %c0_44 = arith.constant 0 : index
    %c0_45 = arith.constant 0 : index
    %c0_46 = arith.constant 0 : index
    %c0_47 = arith.constant 0 : index
    %62 = vector.load %arg8[%c0_44, %c0_45, %c0_46, %c0_47] : memref<1x1x16x128xf32, #tpu.memory_space<vmem>>, vector<1x1x16x128xf32>
    tpu.vector_store %arg8[%c0_44, %c0_45, %c0_46, %c0_47], %61 {strides = array<i32>} : memref<1x1x16x128xf32, #tpu.memory_space<vmem>>, vector<1x1x16x128xf32>,
    return
  }
  func.func @transform_0(%arg0: i32, %arg1: i32) -> (i32, i32, i32, i32) {
    %c1_i32 = arith.constant 1 : i32
    %0 = arith.muli %arg1, %c1_i32 : i32
    %c0_i32 = arith.constant 0 : i32
    %1 = arith.addi %0, %c0_i32 : i32
    %c0_i32_0 = arith.constant 0 : i32
    %c0_i32_1 = arith.constant 0 : i32
    %c0_i32_2 = arith.constant 0 : i32
    return %arg0, %1, %c0_i32_0, %c0_i32_1 : i32, i32, i32, i32
  }
  func.func @transform_1(%arg0: i32, %arg1: i32) -> (i32, i32, i32, i32) {
    %c1_i32 = arith.constant 1 : i32
    %0 = arith.muli %arg1, %c1_i32 : i32
    %c1_i32_0 = arith.constant 1 : i32
    %1 = arith.addi %0, %c1_i32_0 : i32
    %c0_i32 = arith.constant 0 : i32
    %c0_i32_1 = arith.constant 0 : i32
    %c0_i32_2 = arith.constant 0 : i32
    return %arg0, %1, %c0_i32, %c0_i32_1 : i32, i32, i32, i32
  }
  func.func @transform_2(%arg0: i32, %arg1: i32) -> (i32, i32, i32, i32) {
    %c1_i32 = arith.constant 1 : i32
    %0 = arith.muli %arg1, %c1_i32 : i32
    %c2_i32 = arith.constant 2 : i32
    %1 = arith.addi %0, %c2_i32 : i32
    %c0_i32 = arith.constant 0 : i32
    %c0_i32_0 = arith.constant 0 : i32
    %c0_i32_1 = arith.constant 0 : i32
    return %arg0, %1, %c0_i32, %c0_i32_0 : i32, i32, i32, i32
  }
  func.func @transform_3(%arg0: i32, %arg1: i32) -> (i32, i32, i32) {
    %c0_i32 = arith.constant 0 : i32
    %c0_i32_0 = arith.constant 0 : i32
    %c0_i32_1 = arith.constant 0 : i32
    %c0_i32_2 = arith.constant 0 : i32
    return %c0_i32, %c0_i32_0, %c0_i32_1 : i32, i32, i32
  }
  func.func @transform_4(%arg0: i32, %arg1: i32) -> (i32, i32) {
    %c0_i32 = arith.constant 0 : i32
    %c0_i32_0 = arith.constant 0 : i32
    %c0_i32_1 = arith.constant 0 : i32
    return %c0_i32, %c0_i32_0 : i32, i32
  }
  func.func @transform_5(%arg0: i32, %arg1: i32) -> (i32, i32) {
    %c0_i32 = arith.constant 0 : i32
    %c0_i32_0 = arith.constant 0 : i32
    %c0_i32_1 = arith.constant 0 : i32
    return %c0_i32, %c0_i32_0 : i32, i32
  }
  func.func @transform_6(%arg0: i32, %arg1: i32) -> (i32, i32, i32, i32) {
    %c0_i32 = arith.constant 0 : i32
    %c0_i32_0 = arith.constant 0 : i32
    %c0_i32_1 = arith.constant 0 : i32
    return %arg0, %arg1, %c0_i32, %c0_i32_0 : i32, i32, i32, i32
  }
}

</mosaic_0001>

<llo_original>
// kernel: conv_forward.2
$region0: #{conv_forward.2}
  #allocation0 [shape = 'u32[]', space=smem, size = 0x4, offset = 0x4, fixed_abs, tag = 'smem constant byte address 0x4 - core index']
  #allocation1 [shape = 'u32[144,128]{1,0:T(1,128)}', space=vmem, size = 0x12000, scoped, tag = 'internal scratch']
  %s0 = inlined_call_operand.vmem [shape: f32[2,18,18,8], index: 0, kind: input, shape index: {}, may-alias: {0,1,2}]
  %s1 = inlined_call_operand.vmem [shape: f32[2,18,18,8], index: 1, kind: input, shape index: {}, may-alias: {0,1,2}]
  %s2 = inlined_call_operand.vmem [shape: f32[2,18,18,8], index: 2, kind: input, shape index: {}, may-alias: {0,1,2}]
  %s3 = inlined_call_operand.vmem [shape: f32[9,8,128], index: 3, kind: input, shape index: {}]
  %s4 = inlined_call_operand.vmem [shape: f32[2,16,2,128], index: 4, kind: output, shape index: {}]
  %s5 = sld [smem:[#allocation0]]
  $region49: #{conv_forward.2} parent=0
    _
  %s7 = ssub.s32 1, %s5
  %s8 = scalar_select 0, %s7, %s5
  loop: start=0, step=1, limit=34
  $region2: #{conv_forward.2} parent=0 // loop_pre_header
    _
  $region3: #{conv_forward.2} parent=0 // loop_header
    %s10 = sphi 0, %s14
    %p11 = scmp.ge.s32.totalorder %s10, 34
    %s17 = sphi 0, %s29
    %s18 = sphi 0, %s25
    %s19 = sphi 0, %s17
    %s20 = sphi 0, %s18
    %s21 = sphi 0, %s19
    %s22 = sphi 0, %s20
    %s34 = sphi 0, %s36
    %s37 = sphi 0, %s34
    %s38 = sphi 0, %s37
    %s54 = sphi 0, %s38
    %s64 = sphi 0, %s66
    %s67 = sphi 0, %s64
    %s68 = sphi 0, %s67
    %s84 = sphi 0, %s68
    %s94 = sphi 0, %s96
    %s97 = sphi 0, %s94
    %s98 = sphi 0, %s97
    %s114 = sphi 0, %s98
    %s118 = sphi 0, %s118
    %s120 = sphi 0, %s118
    %s121 = sphi 0, %s120
    %s135 = sphi 0, %s121
    %s143 = sphi 0, %s145
    %s146 = sphi 0, %s143
    %s147 = sphi 0, %s146
    %s163 = sphi 0, %s147
  $region4: #{conv_forward.2} parent=0 // loop_header_branch
    %13 = sbr.rel (%p11) target = $region8
  $region5: #{conv_forward.2} parent=0 // loop_body
    %s15 = ssub.s32 %s10, 1
    %s16 = ssub.s32 %s10, 2
    %s23 = sadd.s32 1, %s18
    %p24 = scmp.ge.s32.totalorder %s23, 16
    %s25 = scalar_select %p24, 0, %s23
    %s26 = sadd.s32 1, %s17
    %s27 = scalar_select %p24, %s26, %s17
    %p28 = scmp.ge.s32.totalorder %s27, 2
    %s29 = scalar_select %p28, 0, %s27
    %s30 = ssub.s32 %s17, %s29
    %s31 = ssub.s32 %s18, %s25
    %s32 = sor.u32 %s30, %s31
    %p33 = scmp.eq.s32.totalorder %s32, 0
    %s35 = sadd.s32 %s34, 1
    %s36 = scalar_select %p33, %s34, %s35
    %p39 = pneg %p33
    %p40 = scmp.eq.s32.totalorder %s10, 31
    %p41 = por %p39, %p40
    %p42 = scmp.ne.s32.totalorder %s34, %s37
    %p43 = scmp.eq.s32.totalorder %s10, 0
    %p44 = por %p42, %p43
    %p45 = scmp.ne.s32.totalorder %s34, %s37
    %p46 = scmp.eq.s32.totalorder %s15, 31
    %p47 = por %p45, %p46
    %p48 = scmp.ne.s32.totalorder %s37, %s38
    %p49 = scmp.eq.s32.totalorder %s15, 0
    %p50 = por %p48, %p49
    %p51 = scmp.ne.s32.totalorder %s37, %s38
    %p52 = scmp.eq.s32.totalorder %s16, 31
    %p53 = por %p51, %p52
    %p55 = scmp.ne.s32.totalorder %s38, %s54
    %p56 = scmp.eq.s32.totalorder %s16, 0
    %p57 = por %p55, %p56
    %s58 = sadd.s32 %s18, 1
    %s59 = sadd.s32 %s25, 1
    %s60 = ssub.s32 %s17, %s29
    %s61 = ssub.s32 %s58, %s59
    %s62 = sor.u32 %s60, %s61
    %p63 = scmp.eq.s32.totalorder %s62, 0
    %s65 = sadd.s32 %s64, 1
    %s66 = scalar_select %p63, %s64, %s65
    %p69 = pneg %p63
    %p70 = scmp.eq.s32.totalorder %s10, 31
    %p71 = por %p69, %p70
    %p72 = scmp.ne.s32.totalorder %s64, %s67
    %p73 = scmp.eq.s32.totalorder %s10, 0
    %p74 = por %p72, %p73
    %p75 = scmp.ne.s32.totalorder %s64, %s67
    %p76 = scmp.eq.s32.totalorder %s15, 31
    %p77 = por %p75, %p76
    %p78 = scmp.ne.s32.totalorder %s67, %s68
    %p79 = scmp.eq.s32.totalorder %s15, 0
    %p80 = por %p78, %p79
    %p81 = scmp.ne.s32.totalorder %s67, %s68
    %p82 = scmp.eq.s32.totalorder %s16, 31
    %p83 = por %p81, %p82
    %p85 = scmp.ne.s32.totalorder %s68, %s84
    %p86 = scmp.eq.s32.totalorder %s16, 0
    %p87 = por %p85, %p86
    %s88 = sadd.s32 %s18, 2
    %s89 = sadd.s32 %s25, 2
    %s90 = ssub.s32 %s17, %s29
    %s91 = ssub.s32 %s88, %s89
    %s92 = sor.u32 %s90, %s91
    %p93 = scmp.eq.s32.totalorder %s92, 0
    %s95 = sadd.s32 %s94, 1
    %s96 = scalar_select %p93, %s94, %s95
    %p99 = pneg %p93
    %p100 = scmp.eq.s32.totalorder %s10, 31
    %p101 = por %p99, %p100
    %p102 = scmp.ne.s32.totalorder %s94, %s97
    %p103 = scmp.eq.s32.totalorder %s10, 0
    %p104 = por %p102, %p103
    %p105 = scmp.ne.s32.totalorder %s94, %s97
    %p106 = scmp.eq.s32.totalorder %s15, 31
    %p107 = por %p105, %p106
    %p108 = scmp.ne.s32.totalorder %s97, %s98
    %p109 = scmp.eq.s32.totalorder %s15, 0
    %p110 = por %p108, %p109
    %p111 = scmp.ne.s32.totalorder %s97, %s98
    %p112 = scmp.eq.s32.totalorder %s16, 31
    %p113 = por %p111, %p112
    %p115 = scmp.ne.s32.totalorder %s98, %s114
    %p116 = scmp.eq.s32.totalorder %s16, 0
    %p117 = por %p115, %p116
    %s119 = sadd.s32 %s118, 1
    %p122 = scmp.eq.s32.totalorder %s10, 31
    %p123 = scmp.ne.s32.totalorder %s118, %s120
    %p124 = scmp.eq.s32.totalorder %s10, 0
    %p125 = por %p123, %p124
    %p126 = scmp.ne.s32.totalorder %s118, %s120
    %p127 = scmp.eq.s32.totalorder %s15, 31
    %p128 = por %p126, %p127
    %p129 = scmp.ne.s32.totalorder %s120, %s121
    %p130 = scmp.eq.s32.totalorder %s15, 0
    %p131 = por %p129, %p130
    %p132 = scmp.ne.s32.totalorder %s120, %s121
    %p133 = scmp.eq.s32.totalorder %s16, 31
    %p134 = por %p132, %p133
    %p136 = scmp.ne.s32.totalorder %s121, %s135
    %p137 = scmp.eq.s32.totalorder %s16, 0
    %p138 = por %p136, %p137
    %s139 = ssub.s32 %s17, %s29
    %s140 = ssub.s32 %s18, %s25
    %s141 = sor.u32 %s139, %s140
    %p142 = scmp.eq.s32.totalorder %s141, 0
    %s144 = sadd.s32 %s143, 1
    %s145 = scalar_select %p142, %s143, %s144
    %p148 = pneg %p142
    %p149 = scmp.eq.s32.totalorder %s10, 31
    %p150 = por %p148, %p149
    %p151 = scmp.ne.s32.totalorder %s143, %s146
    %p152 = scmp.eq.s32.totalorder %s10, 0
    %p153 = por %p151, %p152
    %p154 = scmp.ne.s32.totalorder %s143, %s146
    %p155 = scmp.eq.s32.totalorder %s15, 31
    %p156 = por %p154, %p155
    %p157 = scmp.ne.s32.totalorder %s146, %s147
    %p158 = scmp.eq.s32.totalorder %s15, 0
    %p159 = por %p157, %p158
    %p160 = scmp.ne.s32.totalorder %s146, %s147
    %p161 = scmp.eq.s32.totalorder %s16, 31
    %p162 = por %p160, %p161
    %p164 = scmp.ne.s32.totalorder %s147, %s163
    %p165 = scmp.eq.s32.totalorder %s16, 0
    %p166 = por %p164, %p165
    %p167 = scmp.le.s32.totalorder 1, %s10
    %p168 = scmp.lt.s32.totalorder %s10, 33
    %p169 = pnand %p167, %p168
    %p170 = pneg %p169
    // Predicated region
    $region9: #{conv_forward.2} parent=5 // pred_check
      _
    $region10: #{conv_forward.2} parent=5 // pred_check_branch
      %172 = sbr.rel (%p169) target = $region12
    $region11: #{conv_forward.2} parent=5 // pred_region
      %s173 = ssub.s32 %s10, 1
      // Predicated region
      $region13: #{conv_forward.2} parent=11 // pred_check
        %p174 = pneg %p131
      $region14: #{conv_forward.2} parent=11 // pred_check_branch
        %176 = sbr.rel (%p174) target = $region16
      $region15: #{conv_forward.2} parent=11 // pred_region
        _
      $region16: #{conv_forward.2} parent=11 // pred_fallthru
        _
    $region12: #{conv_forward.2} parent=5 // pred_fallthru
      _
    %p177 = scmp.lt.s32.totalorder %s10, 32
    // Predicated region
    $region17: #{conv_forward.2} parent=5 // pred_check
      %p178 = pneg %p177
    $region18: #{conv_forward.2} parent=5 // pred_check_branch
      %180 = sbr.rel (%p178) target = $region20
    $region19: #{conv_forward.2} parent=5 // pred_region
      // Predicated region
      $region21: #{conv_forward.2} parent=19 // pred_check
        %p181 = pneg %p44
      $region22: #{conv_forward.2} parent=19 // pred_check_branch
        %183 = sbr.rel (%p181) target = $region24
      $region23: #{conv_forward.2} parent=19 // pred_region
        %p184 = scmp.lt.s32.totalorder %s17, 1
        %s185 = scalar_select %p184, %s17, 1
        %p186 = scmp.lt.s32.totalorder %s18, 17
        %s187 = scalar_select %p186, %s18, 17
        %s188 = smul.addr %s187, 3
        %s189 = smul.addr %s185, 54
        %s190 = sadd.s32 %s188, %s189
        %s191 = smul.addr %s190, 8
        %s192 = scalar_lea.vmem %s0, %s191
      $region24: #{conv_forward.2} parent=19 // pred_fallthru
        _
      // Predicated region
      $region25: #{conv_forward.2} parent=19 // pred_check
        %p193 = pneg %p74
      $region26: #{conv_forward.2} parent=19 // pred_check_branch
        %195 = sbr.rel (%p193) target = $region28
      $region27: #{conv_forward.2} parent=19 // pred_region
        %s196 = sadd.s32 %s18, 1
        %p197 = scmp.lt.s32.totalorder %s17, 1
        %s198 = scalar_select %p197, %s17, 1
        %p199 = scmp.lt.s32.totalorder %s196, 17
        %s200 = scalar_select %p199, %s196, 17
        %s201 = smul.addr %s200, 3
        %s202 = smul.addr %s198, 54
        %s203 = sadd.s32 %s201, %s202
        %s204 = smul.addr %s203, 8
        %s205 = scalar_lea.vmem %s1, %s204
        %s206 = sadd.s32 %s18, 1
      $region28: #{conv_forward.2} parent=19 // pred_fallthru
        _
      // Predicated region
      $region29: #{conv_forward.2} parent=19 // pred_check
        %p207 = pneg %p104
      $region30: #{conv_forward.2} parent=19 // pred_check_branch
        %209 = sbr.rel (%p207) target = $region32
      $region31: #{conv_forward.2} parent=19 // pred_region
        %s210 = sadd.s32 %s18, 2
        %p211 = scmp.lt.s32.totalorder %s17, 1
        %s212 = scalar_select %p211, %s17, 1
        %p213 = scmp.lt.s32.totalorder %s210, 17
        %s214 = scalar_select %p213, %s210, 17
        %s215 = smul.addr %s214, 3
        %s216 = smul.addr %s212, 54
        %s217 = sadd.s32 %s215, %s216
        %s218 = smul.addr %s217, 8
        %s219 = scalar_lea.vmem %s2, %s218
        %s220 = sadd.s32 %s18, 2
      $region32: #{conv_forward.2} parent=19 // pred_fallthru
        _
    $region20: #{conv_forward.2} parent=5 // pred_fallthru
      _
    %p221 = scmp.le.s32.totalorder 1, %s10
    %p222 = scmp.lt.s32.totalorder %s10, 33
    %p223 = pnand %p221, %p222
    %p224 = pneg %p223
    // Predicated region
    $region33: #{conv_forward.2} parent=5 // pred_check
      _
    $region34: #{conv_forward.2} parent=5 // pred_check_branch
      %226 = sbr.rel (%p223) target = $region36
    $region35: #{conv_forward.2} parent=5 // pred_region
      %s227 = ssub.s32 %s10, 1
      %p228 = scmp.lt.s32.totalorder %s19, 1
      %s229 = scalar_select %p228, %s19, 1
      %p230 = scmp.lt.s32.totalorder %s20, 17
      %s231 = scalar_select %p230, %s20, 17
      %s232 = smul.addr %s231, 3
      %s233 = smul.addr %s229, 54
      %s234 = sadd.s32 %s232, %s233
      %s235 = smul.addr %s234, 8
      %s236 = scalar_lea.vmem %s0, %s235
      %p237 = pneg %p50
      %p238 = pneg %p47
      %s239 = sadd.s32 %s20, 1
      %p240 = scmp.lt.s32.totalorder %s19, 1
      %s241 = scalar_select %p240, %s19, 1
      %p242 = scmp.lt.s32.totalorder %s239, 17
      %s243 = scalar_select %p242, %s239, 17
      %s244 = smul.addr %s243, 3
      %s245 = smul.addr %s241, 54
      %s246 = sadd.s32 %s244, %s245
      %s247 = smul.addr %s246, 8
      %s248 = scalar_lea.vmem %s1, %s247
      %p249 = pneg %p80
      %p250 = pneg %p77
      %s251 = sadd.s32 %s20, 2
      %p252 = scmp.lt.s32.totalorder %s19, 1
      %s253 = scalar_select %p252, %s19, 1
      %p254 = scmp.lt.s32.totalorder %s251, 17
      %s255 = scalar_select %p254, %s251, 17
      %s256 = smul.addr %s255, 3
      %s257 = smul.addr %s253, 54
      %s258 = sadd.s32 %s256, %s257
      %s259 = smul.addr %s258, 8
      %s260 = scalar_lea.vmem %s2, %s259
      %p261 = pneg %p110
      %p262 = pneg %p107
      %p263 = pneg %p131
      %p264 = pneg %p128
      %p265 = pneg %p159
      %p266 = pneg %p156
      %p267 = scmp.lt.s32.totalorder %s19, 1
      %s268 = scalar_select %p267, %s19, 1
      %p269 = scmp.lt.s32.totalorder %s20, 15
      %s270 = scalar_select %p269, %s20, 15
      %s271 = smul.addr %s268, 16
      %s272 = sadd.s32 %s270, %s271
      %s273 = smul.addr %s272, 2
      %s274 = scalar_lea.vmem %s4, %s273
      %p275 = scmp.lt.s32.totalorder %s19, 1
      %s276 = scalar_select %p275, %s19, 1
      %p277 = scmp.lt.s32.totalorder %s20, 17
      %s278 = scalar_select %p277, %s20, 17
      %s279 = smul.addr %s278, 3
      %s280 = smul.addr %s276, 54
      %s281 = sadd.s32 %s279, %s280
      %s282 = smul.addr %s281, 8
      %s283 = scalar_lea.vmem %s0, %s282
      %s284 = sadd.s32 %s20, 1
      %p285 = scmp.lt.s32.totalorder %s19, 1
      %s286 = scalar_select %p285, %s19, 1
      %p287 = scmp.lt.s32.totalorder %s284, 17
      %s288 = scalar_select %p287, %s284, 17
      %s289 = smul.addr %s288, 3
      %s290 = smul.addr %s286, 54
      %s291 = sadd.s32 %s289, %s290
      %s292 = smul.addr %s291, 8
      %s293 = scalar_lea.vmem %s1, %s292
      %s294 = sadd.s32 %s20, 1
      %s295 = sadd.s32 %s20, 2
      %p296 = scmp.lt.s32.totalorder %s19, 1
      %s297 = scalar_select %p296, %s19, 1
      %p298 = scmp.lt.s32.totalorder %s295, 17
      %s299 = scalar_select %p298, %s295, 17
      %s300 = smul.addr %s299, 3
      %s301 = smul.addr %s297, 54
      %s302 = sadd.s32 %s300, %s301
      %s303 = smul.addr %s302, 8
      %s304 = scalar_lea.vmem %s2, %s303
      %s305 = sadd.s32 %s20, 2
      %p306 = scmp.lt.s32.totalorder %s19, 1
      %s307 = scalar_select %p306, %s19, 1
      %p308 = scmp.lt.s32.totalorder %s20, 15
      %s309 = scalar_select %p308, %s20, 15
      %s310 = smul.addr %s307, 16
      %s311 = sadd.s32 %s309, %s310
      %s312 = smul.addr %s311, 2
      %s313 = scalar_lea.vmem %s4, %s312
      %v314 = vld [vmem:[%s283] sm:$0xff]
      %v315 = vld [vmem:[%s283 + $0x8] sm:$0xff]
      %v316 = vld [vmem:[%s283 + $0x10] sm:$0x3]
      %v317 = vld [vmem:[%s3] sm:$0xff]
      %s318 = scalar_lea.vmem %s3, 8
      %v319 = vld [vmem:[%s318] sm:$0xff]
      %vm323 = vcmask 1046528
      %v324 = vrot.slane %v314, 1
      %v325 = vrot.slane %v315, 1
      %v326 = vsel %vm323, %v324, %v325
      %v327 = vrot.slane %v316, 1
      %v328 = vsel %vm323, %v325, %v327
      %vm329 = vcmask 64512
      %v330 = vsel %vm329, %v326, 0
      %v332 = vsel %vm329, %v328, 0
      %334 = vmatprep.subr.mxu0 0.0
      %335 = vmatpush1.msra.mxu0 %v319
      %336 = vmatprep.subr.mxu0 0.0
      %337 = vmatpush1.msra.mxu0 0.0
      %338 = vmatprep.subr.mxu0 0.0
      %339 = vmatpush1.msra.mxu0 0.0
      %340 = vmatprep.subr.mxu0 0.0
      %341 = vmatpush1.msra.mxu0 0.0
      %342 = vmatprep.subr.mxu0 0.0
      %343 = vmatpush1.msra.mxu0 0.0
      %344 = vmatprep.subr.mxu0 0.0
      %345 = vmatpush1.msra.mxu0 0.0
      %346 = vmatprep.subr.mxu0 0.0
      %347 = vmatpush1.msra.mxu0 0.0
      %348 = vmatprep.subr.mxu0 0.0
      %349 = vmatpush1.msra.mxu0 0.0
      %350 = vmatprep.subr.mxu0 0.0
      %351 = vmatpush1.msra.mxu0 0.0
      %352 = vmatprep.subr.mxu0 0.0
      %353 = vmatpush1.msra.mxu0 0.0
      %354 = vmatprep.subr.mxu0 0.0
      %355 = vmatpush1.msra.mxu0 0.0
      %356 = vmatprep.subr.mxu0 0.0
      %357 = vmatpush1.msra.mxu0 0.0
      %358 = vmatprep.subr.mxu0 0.0
      %359 = vmatpush1.msra.mxu0 0.0
      %360 = vmatprep.subr.mxu0 0.0
      %361 = vmatpush1.msra.mxu0 0.0
      %362 = vmatprep.subr.mxu0 0.0
      %363 = vmatpush1.msra.mxu0 0.0
      %364 = vmatprep.subr.mxu0 0.0
      %365 = vmatpush1.msra.mxu0 0.0
      %366 = vmatprep.subr.mxu0 0.0
      %367 = vmatpush1.msra.mxu0 0.0
      %368 = vmatprep.subr.mxu0 0.0
      %369 = vmatpush1.msra.mxu0 0.0
      %370 = vmatprep.subr.mxu0 0.0
      %371 = vmatpush1.msra.mxu0 0.0
      %372 = vmatprep.subr.mxu0 0.0
      %373 = vmatpush1.msra.mxu0 0.0
      %374 = vmatprep.subr.mxu0 0.0
      %375 = vmatpush1.msra.mxu0 0.0
      %376 = vmatprep.subr.mxu0 0.0
      %377 = vmatpush1.msra.mxu0 0.0
      %378 = vmatprep.subr.mxu0 0.0
      %379 = vmatpush1.msra.mxu0 0.0
      %380 = vmatprep.subr.mxu0 0.0
      %381 = vmatpush1.msra.mxu0 0.0
      %382 = vmatprep.subr.mxu0 0.0
      %383 = vmatpush1.msra.mxu0 0.0
      %384 = vmatprep.subr.mxu0 0.0
      %385 = vmatpush1.msra.mxu0 0.0
      %386 = vmatprep.subr.mxu0 0.0
      %387 = vmatpush1.msra.mxu0 0.0
      %388 = vmatprep.subr.mxu0 0.0
      %389 = vmatpush1.msra.mxu0 0.0
      %390 = vmatprep.subr.mxu0 0.0
      %391 = vmatpush1.msra.mxu0 0.0
      %392 = vmatprep.subr.mxu0 0.0
      %393 = vmatpush1.msra.mxu0 0.0
      %394 = vmatprep.subr.mxu0 0.0
      %395 = vmatpush1.msra.mxu0 0.0
      %396 = vmatprep.subr.mxu0 0.0
      %397 = vmatpush1.msra.mxu0 0.0
      %398 = vmatprep.mubr.f32.mxu0 0.0
      %399 = vmatmul.mubr.f32.gmra.mrb[0].mxu0 %v330
      %v400 = vpop.f32.mrb[0].mxu0
      %v401 = vadd.f32 0.0, %v400
      %v402 = vpop.f32.mrb[0].mxu0
      %403 = vmatprep.mubr.f32.mxu0 0.0
      %404 = vmatmul.mubr.f32.gmra.mrb[0].mxu0 %v332
      %v405 = vpop.f32.mrb[0].mxu0
      %v406 = vadd.f32 0.0, %v405
      %v407 = vpop.f32.mrb[0].mxu0
      %408 = vdwg.mxu0
      %v409 = vsel %vm329, %v314, 0
      %v411 = vsel %vm329, %v315, 0
      %413 = vmatprep.subr.mxu0 0.0
      %414 = vmatpush1.msra.mxu0 %v317
      %415 = vmatprep.subr.mxu0 0.0
      %416 = vmatpush1.msra.mxu0 0.0
      %417 = vmatprep.subr.mxu0 0.0
      %418 = vmatpush1.msra.mxu0 0.0
      %419 = vmatprep.subr.mxu0 0.0
      %420 = vmatpush1.msra.mxu0 0.0
      %421 = vmatprep.subr.mxu0 0.0
      %422 = vmatpush1.msra.mxu0 0.0
      %423 = vmatprep.subr.mxu0 0.0
      %424 = vmatpush1.msra.mxu0 0.0
      %425 = vmatprep.subr.mxu0 0.0
      %426 = vmatpush1.msra.mxu0 0.0
      %427 = vmatprep.subr.mxu0 0.0
      %428 = vmatpush1.msra.mxu0 0.0
      %429 = vmatprep.subr.mxu0 0.0
      %430 = vmatpush1.msra.mxu0 0.0
      %431 = vmatprep.subr.mxu0 0.0
      %432 = vmatpush1.msra.mxu0 0.0
      %433 = vmatprep.subr.mxu0 0.0
      %434 = vmatpush1.msra.mxu0 0.0
      %435 = vmatprep.subr.mxu0 0.0
      %436 = vmatpush1.msra.mxu0 0.0
      %437 = vmatprep.subr.mxu0 0.0
      %438 = vmatpush1.msra.mxu0 0.0
      %439 = vmatprep.subr.mxu0 0.0
      %440 = vmatpush1.msra.mxu0 0.0
      %441 = vmatprep.subr.mxu0 0.0
      %442 = vmatpush1.msra.mxu0 0.0
      %443 = vmatprep.subr.mxu0 0.0
      %444 = vmatpush1.msra.mxu0 0.0
      %445 = vmatprep.subr.mxu0 0.0
      %446 = vmatpush1.msra.mxu0 0.0
      %447 = vmatprep.subr.mxu0 0.0
      %448 = vmatpush1.msra.mxu0 0.0
      %449 = vmatprep.subr.mxu0 0.0
      %450 = vmatpush1.msra.mxu0 0.0
      %451 = vmatprep.subr.mxu0 0.0
      %452 = vmatpush1.msra.mxu0 0.0
      %453 = vmatprep.subr.mxu0 0.0
      %454 = vmatpush1.msra.mxu0 0.0
      %455 = vmatprep.subr.mxu0 0.0
      %456 = vmatpush1.msra.mxu0 0.0
      %457 = vmatprep.subr.mxu0 0.0
      %458 = vmatpush1.msra.mxu0 0.0
      %459 = vmatprep.subr.mxu0 0.0
      %460 = vmatpush1.msra.mxu0 0.0
      %461 = vmatprep.subr.mxu0 0.0
      %462 = vmatpush1.msra.mxu0 0.0
      %463 = vmatprep.subr.mxu0 0.0
      %464 = vmatpush1.msra.mxu0 0.0
      %465 = vmatprep.subr.mxu0 0.0
      %466 = vmatpush1.msra.mxu0 0.0
      %467 = vmatprep.subr.mxu0 0.0
      %468 = vmatpush1.msra.mxu0 0.0
      %469 = vmatprep.subr.mxu0 0.0
      %470 = vmatpush1.msra.mxu0 0.0
      %471 = vmatprep.subr.mxu0 0.0
      %472 = vmatpush1.msra.mxu0 0.0
      %473 = vmatprep.subr.mxu0 0.0
      %474 = vmatpush1.msra.mxu0 0.0
      %475 = vmatprep.subr.mxu0 0.0
      %476 = vmatpush1.msra.mxu0 0.0
      %477 = vmatprep.mubr.f32.mxu0 0.0
      %478 = vmatmul.mubr.f32.gmra.mrb[0].mxu0 %v409
      %v479 = vpop.f32.mrb[0].mxu0
      %v480 = vadd.f32 %v401, %v479
      %v481 = vpop.f32.mrb[0].mxu0
      %482 = vmatprep.mubr.f32.mxu0 0.0
      %483 = vmatmul.mubr.f32.gmra.mrb[0].mxu0 %v411
      %v484 = vpop.f32.mrb[0].mxu0
      %v485 = vadd.f32 %v406, %v484
      %v486 = vpop.f32.mrb[0].mxu0
      %487 = vdwg.mxu0
      %s488 = scalar_lea.vmem %s3, 16
      %v489 = vld [vmem:[%s488] sm:$0xff]
      %vm490 = vcmask 1045504
      %v491 = vrot.slane %v314, 2
      %v492 = vrot.slane %v315, 2
      %v493 = vsel %vm490, %v491, %v492
      %v494 = vrot.slane %v316, 2
      %v495 = vsel %vm490, %v492, %v494
      %v496 = vsel %vm329, %v493, 0
      %v498 = vsel %vm329, %v495, 0
      %500 = vmatprep.subr.mxu0 0.0
      %501 = vmatpush1.msra.mxu0 %v489
      %502 = vmatprep.subr.mxu0 0.0
      %503 = vmatpush1.msra.mxu0 0.0
      %504 = vmatprep.subr.mxu0 0.0
      %505 = vmatpush1.msra.mxu0 0.0
      %506 = vmatprep.subr.mxu0 0.0
      %507 = vmatpush1.msra.mxu0 0.0
      %508 = vmatprep.subr.mxu0 0.0
      %509 = vmatpush1.msra.mxu0 0.0
      %510 = vmatprep.subr.mxu0 0.0
      %511 = vmatpush1.msra.mxu0 0.0
      %512 = vmatprep.subr.mxu0 0.0
      %513 = vmatpush1.msra.mxu0 0.0
      %514 = vmatprep.subr.mxu0 0.0
      %515 = vmatpush1.msra.mxu0 0.0
      %516 = vmatprep.subr.mxu0 0.0
      %517 = vmatpush1.msra.mxu0 0.0
      %518 = vmatprep.subr.mxu0 0.0
      %519 = vmatpush1.msra.mxu0 0.0
      %520 = vmatprep.subr.mxu0 0.0
      %521 = vmatpush1.msra.mxu0 0.0
      %522 = vmatprep.subr.mxu0 0.0
      %523 = vmatpush1.msra.mxu0 0.0
      %524 = vmatprep.subr.mxu0 0.0
      %525 = vmatpush1.msra.mxu0 0.0
      %526 = vmatprep.subr.mxu0 0.0
      %527 = vmatpush1.msra.mxu0 0.0
      %528 = vmatprep.subr.mxu0 0.0
      %529 = vmatpush1.msra.mxu0 0.0
      %530 = vmatprep.subr.mxu0 0.0
      %531 = vmatpush1.msra.mxu0 0.0
      %532 = vmatprep.subr.mxu0 0.0
      %533 = vmatpush1.msra.mxu0 0.0
      %534 = vmatprep.subr.mxu0 0.0
      %535 = vmatpush1.msra.mxu0 0.0
      %536 = vmatprep.subr.mxu0 0.0
      %537 = vmatpush1.msra.mxu0 0.0
      %538 = vmatprep.subr.mxu0 0.0
      %539 = vmatpush1.msra.mxu0 0.0
      %540 = vmatprep.subr.mxu0 0.0
      %541 = vmatpush1.msra.mxu0 0.0
      %542 = vmatprep.subr.mxu0 0.0
      %543 = vmatpush1.msra.mxu0 0.0
      %544 = vmatprep.subr.mxu0 0.0
      %545 = vmatpush1.msra.mxu0 0.0
      %546 = vmatprep.subr.mxu0 0.0
      %547 = vmatpush1.msra.mxu0 0.0
      %548 = vmatprep.subr.mxu0 0.0
      %549 = vmatpush1.msra.mxu0 0.0
      %550 = vmatprep.subr.mxu0 0.0
      %551 = vmatpush1.msra.mxu0 0.0
      %552 = vmatprep.subr.mxu0 0.0
      %553 = vmatpush1.msra.mxu0 0.0
      %554 = vmatprep.subr.mxu0 0.0
      %555 = vmatpush1.msra.mxu0 0.0
      %556 = vmatprep.subr.mxu0 0.0
      %557 = vmatpush1.msra.mxu0 0.0
      %558 = vmatprep.subr.mxu0 0.0
      %559 = vmatpush1.msra.mxu0 0.0
      %560 = vmatprep.subr.mxu0 0.0
      %561 = vmatpush1.msra.mxu0 0.0
      %562 = vmatprep.subr.mxu0 0.0
      %563 = vmatpush1.msra.mxu0 0.0
      %564 = vmatprep.mubr.f32.mxu0 0.0
      %565 = vmatmul.mubr.f32.gmra.mrb[0].mxu0 %v496
      %v566 = vpop.f32.mrb[0].mxu0
      %v567 = vadd.f32 0.0, %v566
      %v568 = vpop.f32.mrb[0].mxu0
      %569 = vmatprep.mubr.f32.mxu0 0.0
      %570 = vmatmul.mubr.f32.gmra.mrb[0].mxu0 %v498
      %v571 = vpop.f32.mrb[0].mxu0
      %v572 = vadd.f32 0.0, %v571
      %v573 = vpop.f32.mrb[0].mxu0
      %574 = vdwg.mxu0
      %v575 = vadd.f32 %v480, %v567
      %v576 = vadd.f32 %v485, %v572
      %v577 = vld [vmem:[%s293] sm:$0xff]
      %v578 = vld [vmem:[%s293 + $0x8] sm:$0xff]
      %v579 = vld [vmem:[%s293 + $0x10] sm:$0x3]
      %s580 = scalar_lea.vmem %s3, 24
      %v581 = vld [vmem:[%s580] sm:$0xff]
      %v583 = vsel %vm329, %v577, 0
      %v586 = vsel %vm329, %v578, 0
      %588 = vmatprep.subr.mxu0 0.0
      %589 = vmatpush1.msra.mxu0 %v581
      %590 = vmatprep.subr.mxu0 0.0
      %591 = vmatpush1.msra.mxu0 0.0
      %592 = vmatprep.subr.mxu0 0.0
      %593 = vmatpush1.msra.mxu0 0.0
      %594 = vmatprep.subr.mxu0 0.0
      %595 = vmatpush1.msra.mxu0 0.0
      %596 = vmatprep.subr.mxu0 0.0
      %597 = vmatpush1.msra.mxu0 0.0
      %598 = vmatprep.subr.mxu0 0.0
      %599 = vmatpush1.msra.mxu0 0.0
      %600 = vmatprep.subr.mxu0 0.0
      %601 = vmatpush1.msra.mxu0 0.0
      %602 = vmatprep.subr.mxu0 0.0
      %603 = vmatpush1.msra.mxu0 0.0
      %604 = vmatprep.subr.mxu0 0.0
      %605 = vmatpush1.msra.mxu0 0.0
      %606 = vmatprep.subr.mxu0 0.0
      %607 = vmatpush1.msra.mxu0 0.0
      %608 = vmatprep.subr.mxu0 0.0
      %609 = vmatpush1.msra.mxu0 0.0
      %610 = vmatprep.subr.mxu0 0.0
      %611 = vmatpush1.msra.mxu0 0.0
      %612 = vmatprep.subr.mxu0 0.0
      %613 = vmatpush1.msra.mxu0 0.0
      %614 = vmatprep.subr.mxu0 0.0
      %615 = vmatpush1.msra.mxu0 0.0
      %616 = vmatprep.subr.mxu0 0.0
      %617 = vmatpush1.msra.mxu0 0.0
      %618 = vmatprep.subr.mxu0 0.0
      %619 = vmatpush1.msra.mxu0 0.0
      %620 = vmatprep.subr.mxu0 0.0
      %621 = vmatpush1.msra.mxu0 0.0
      %622 = vmatprep.subr.mxu0 0.0
      %623 = vmatpush1.msra.mxu0 0.0
      %624 = vmatprep.subr.mxu0 0.0
      %625 = vmatpush1.msra.mxu0 0.0
      %626 = vmatprep.subr.mxu0 0.0
      %627 = vmatpush1.msra.mxu0 0.0
      %628 = vmatprep.subr.mxu0 0.0
      %629 = vmatpush1.msra.mxu0 0.0
      %630 = vmatprep.subr.mxu0 0.0
      %631 = vmatpush1.msra.mxu0 0.0
      %632 = vmatprep.subr.mxu0 0.0
      %633 = vmatpush1.msra.mxu0 0.0
      %634 = vmatprep.subr.mxu0 0.0
      %635 = vmatpush1.msra.mxu0 0.0
      %636 = vmatprep.subr.mxu0 0.0
      %637 = vmatpush1.msra.mxu0 0.0
      %638 = vmatprep.subr.mxu0 0.0
      %639 = vmatpush1.msra.mxu0 0.0
      %640 = vmatprep.subr.mxu0 0.0
      %641 = vmatpush1.msra.mxu0 0.0
      %642 = vmatprep.subr.mxu0 0.0
      %643 = vmatpush1.msra.mxu0 0.0
      %644 = vmatprep.subr.mxu0 0.0
      %645 = vmatpush1.msra.mxu0 0.0
      %646 = vmatprep.subr.mxu0 0.0
      %647 = vmatpush1.msra.mxu0 0.0
      %648 = vmatprep.subr.mxu0 0.0
      %649 = vmatpush1.msra.mxu0 0.0
      %650 = vmatprep.subr.mxu0 0.0
      %651 = vmatpush1.msra.mxu0 0.0
      %652 = vmatprep.mubr.f32.mxu0 0.0
      %653 = vmatmul.mubr.f32.gmra.mrb[0].mxu0 %v583
      %v654 = vpop.f32.mrb[0].mxu0
      %v655 = vadd.f32 0.0, %v654
      %v656 = vpop.f32.mrb[0].mxu0
      %657 = vmatprep.mubr.f32.mxu0 0.0
      %658 = vmatmul.mubr.f32.gmra.mrb[0].mxu0 %v586
      %v659 = vpop.f32.mrb[0].mxu0
      %v660 = vadd.f32 0.0, %v659
      %v661 = vpop.f32.mrb[0].mxu0
      %662 = vdwg.mxu0
      %v663 = vadd.f32 %v575, %v655
      %v664 = vadd.f32 %v576, %v660
      %s665 = scalar_lea.vmem %s3, 32
      %v666 = vld [vmem:[%s665] sm:$0xff]
      %v668 = vrot.slane %v577, 1
      %v669 = vrot.slane %v578, 1
      %v670 = vsel %vm323, %v668, %v669
      %v671 = vrot.slane %v579, 1
      %v672 = vsel %vm323, %v669, %v671
      %v673 = vsel %vm329, %v670, 0
      %v675 = vsel %vm329, %v672, 0
      %677 = vmatprep.subr.mxu0 0.0
      %678 = vmatpush1.msra.mxu0 %v666
      %679 = vmatprep.subr.mxu0 0.0
      %680 = vmatpush1.msra.mxu0 0.0
      %681 = vmatprep.subr.mxu0 0.0
      %682 = vmatpush1.msra.mxu0 0.0
      %683 = vmatprep.subr.mxu0 0.0
      %684 = vmatpush1.msra.mxu0 0.0
      %685 = vmatprep.subr.mxu0 0.0
      %686 = vmatpush1.msra.mxu0 0.0
      %687 = vmatprep.subr.mxu0 0.0
      %688 = vmatpush1.msra.mxu0 0.0
      %689 = vmatprep.subr.mxu0 0.0
      %690 = vmatpush1.msra.mxu0 0.0
      %691 = vmatprep.subr.mxu0 0.0
      %692 = vmatpush1.msra.mxu0 0.0
      %693 = vmatprep.subr.mxu0 0.0
      %694 = vmatpush1.msra.mxu0 0.0
      %695 = vmatprep.subr.mxu0 0.0
      %696 = vmatpush1.msra.mxu0 0.0
      %697 = vmatprep.subr.mxu0 0.0
      %698 = vmatpush1.msra.mxu0 0.0
      %699 = vmatprep.subr.mxu0 0.0
      %700 = vmatpush1.msra.mxu0 0.0
      %701 = vmatprep.subr.mxu0 0.0
      %702 = vmatpush1.msra.mxu0 0.0
      %703 = vmatprep.subr.mxu0 0.0
      %704 = vmatpush1.msra.mxu0 0.0
      %705 = vmatprep.subr.mxu0 0.0
      %706 = vmatpush1.msra.mxu0 0.0
      %707 = vmatprep.subr.mxu0 0.0
      %708 = vmatpush1.msra.mxu0 0.0
      %709 = vmatprep.subr.mxu0 0.0
      %710 = vmatpush1.msra.mxu0 0.0
      %711 = vmatprep.subr.mxu0 0.0
      %712 = vmatpush1.msra.mxu0 0.0
      %713 = vmatprep.subr.mxu0 0.0
      %714 = vmatpush1.msra.mxu0 0.0
      %715 = vmatprep.subr.mxu0 0.0
      %716 = vmatpush1.msra.mxu0 0.0
      %717 = vmatprep.subr.mxu0 0.0
      %718 = vmatpush1.msra.mxu0 0.0
      %719 = vmatprep.subr.mxu0 0.0
      %720 = vmatpush1.msra.mxu0 0.0
      %721 = vmatprep.subr.mxu0 0.0
      %722 = vmatpush1.msra.mxu0 0.0
      %723 = vmatprep.subr.mxu0 0.0
      %724 = vmatpush1.msra.mxu0 0.0
      %725 = vmatprep.subr.mxu0 0.0
      %726 = vmatpush1.msra.mxu0 0.0
      %727 = vmatprep.subr.mxu0 0.0
      %728 = vmatpush1.msra.mxu0 0.0
      %729 = vmatprep.subr.mxu0 0.0
      %730 = vmatpush1.msra.mxu0 0.0
      %731 = vmatprep.subr.mxu0 0.0
      %732 = vmatpush1.msra.mxu0 0.0
      %733 = vmatprep.subr.mxu0 0.0
      %734 = vmatpush1.msra.mxu0 0.0
      %735 = vmatprep.subr.mxu0 0.0
      %736 = vmatpush1.msra.mxu0 0.0
      %737 = vmatprep.subr.mxu0 0.0
      %738 = vmatpush1.msra.mxu0 0.0
      %739 = vmatprep.subr.mxu0 0.0
      %740 = vmatpush1.msra.mxu0 0.0
      %741 = vmatprep.mubr.f32.mxu0 0.0
      %742 = vmatmul.mubr.f32.gmra.mrb[0].mxu0 %v673
      %v743 = vpop.f32.mrb[0].mxu0
      %v744 = vadd.f32 0.0, %v743
      %v745 = vpop.f32.mrb[0].mxu0
      %746 = vmatprep.mubr.f32.mxu0 0.0
      %747 = vmatmul.mubr.f32.gmra.mrb[0].mxu0 %v675
      %v748 = vpop.f32.mrb[0].mxu0
      %v749 = vadd.f32 0.0, %v748
      %v750 = vpop.f32.mrb[0].mxu0
      %751 = vdwg.mxu0
      %v752 = vadd.f32 %v663, %v744
      %v753 = vadd.f32 %v664, %v749
      %s754 = scalar_lea.vmem %s3, 40
      %v755 = vld [vmem:[%s754] sm:$0xff]
      %v756 = vrot.slane %v577, 2
      %v757 = vrot.slane %v578, 2
      %v758 = vsel %vm490, %v756, %v757
      %v759 = vrot.slane %v579, 2
      %v760 = vsel %vm490, %v757, %v759
      %v761 = vsel %vm329, %v758, 0
      %v763 = vsel %vm329, %v760, 0
      %765 = vmatprep.subr.mxu0 0.0
      %766 = vmatpush1.msra.mxu0 %v755
      %767 = vmatprep.subr.mxu0 0.0
      %768 = vmatpush1.msra.mxu0 0.0
      %769 = vmatprep.subr.mxu0 0.0
      %770 = vmatpush1.msra.mxu0 0.0
      %771 = vmatprep.subr.mxu0 0.0
      %772 = vmatpush1.msra.mxu0 0.0
      %773 = vmatprep.subr.mxu0 0.0
      %774 = vmatpush1.msra.mxu0 0.0
      %775 = vmatprep.subr.mxu0 0.0
      %776 = vmatpush1.msra.mxu0 0.0
      %777 = vmatprep.subr.mxu0 0.0
      %778 = vmatpush1.msra.mxu0 0.0
      %779 = vmatprep.subr.mxu0 0.0
      %780 = vmatpush1.msra.mxu0 0.0
      %781 = vmatprep.subr.mxu0 0.0
      %782 = vmatpush1.msra.mxu0 0.0
      %783 = vmatprep.subr.mxu0 0.0
      %784 = vmatpush1.msra.mxu0 0.0
      %785 = vmatprep.subr.mxu0 0.0
      %786 = vmatpush1.msra.mxu0 0.0
      %787 = vmatprep.subr.mxu0 0.0
      %788 = vmatpush1.msra.mxu0 0.0
      %789 = vmatprep.subr.mxu0 0.0
      %790 = vmatpush1.msra.mxu0 0.0
      %791 = vmatprep.subr.mxu0 0.0
      %792 = vmatpush1.msra.mxu0 0.0
      %793 = vmatprep.subr.mxu0 0.0
      %794 = vmatpush1.msra.mxu0 0.0
      %795 = vmatprep.subr.mxu0 0.0
      %796 = vmatpush1.msra.mxu0 0.0
      %797 = vmatprep.subr.mxu0 0.0
      %798 = vmatpush1.msra.mxu0 0.0
      %799 = vmatprep.subr.mxu0 0.0
      %800 = vmatpush1.msra.mxu0 0.0
      %801 = vmatprep.subr.mxu0 0.0
      %802 = vmatpush1.msra.mxu0 0.0
      %803 = vmatprep.subr.mxu0 0.0
      %804 = vmatpush1.msra.mxu0 0.0
      %805 = vmatprep.subr.mxu0 0.0
      %806 = vmatpush1.msra.mxu0 0.0
      %807 = vmatprep.subr.mxu0 0.0
      %808 = vmatpush1.msra.mxu0 0.0
      %809 = vmatprep.subr.mxu0 0.0
      %810 = vmatpush1.msra.mxu0 0.0
      %811 = vmatprep.subr.mxu0 0.0
      %812 = vmatpush1.msra.mxu0 0.0
      %813 = vmatprep.subr.mxu0 0.0
      %814 = vmatpush1.msra.mxu0 0.0
      %815 = vmatprep.subr.mxu0 0.0
      %816 = vmatpush1.msra.mxu0 0.0
      %817 = vmatprep.subr.mxu0 0.0
      %818 = vmatpush1.msra.mxu0 0.0
      %819 = vmatprep.subr.mxu0 0.0
      %820 = vmatpush1.msra.mxu0 0.0
      %821 = vmatprep.subr.mxu0 0.0
      %822 = vmatpush1.msra.mxu0 0.0
      %823 = vmatprep.subr.mxu0 0.0
      %824 = vmatpush1.msra.mxu0 0.0
      %825 = vmatprep.subr.mxu0 0.0
      %826 = vmatpush1.msra.mxu0 0.0
      %827 = vmatprep.subr.mxu0 0.0
      %828 = vmatpush1.msra.mxu0 0.0
      %829 = vmatprep.mubr.f32.mxu0 0.0
      %830 = vmatmul.mubr.f32.gmra.mrb[0].mxu0 %v761
      %v831 = vpop.f32.mrb[0].mxu0
      %v832 = vadd.f32 0.0, %v831
      %v833 = vpop.f32.mrb[0].mxu0
      %834 = vmatprep.mubr.f32.mxu0 0.0
      %835 = vmatmul.mubr.f32.gmra.mrb[0].mxu0 %v763
      %v836 = vpop.f32.mrb[0].mxu0
      %v837 = vadd.f32 0.0, %v836
      %v838 = vpop.f32.mrb[0].mxu0
      %839 = vdwg.mxu0
      %v840 = vadd.f32 %v752, %v832
      %v841 = vadd.f32 %v753, %v837
      %v842 = vld [vmem:[%s304] sm:$0xff]
      %v843 = vld [vmem:[%s304 + $0x8] sm:$0xff]
      %v844 = vld [vmem:[%s304 + $0x10] sm:$0x3]
      %s845 = scalar_lea.vmem %s3, 48
      %v846 = vld [vmem:[%s845] sm:$0xff]
      %v848 = vsel %vm329, %v842, 0
      %v851 = vsel %vm329, %v843, 0
      %853 = vmatprep.subr.mxu0 0.0
      %854 = vmatpush1.msra.mxu0 %v846
      %855 = vmatprep.subr.mxu0 0.0
      %856 = vmatpush1.msra.mxu0 0.0
      %857 = vmatprep.subr.mxu0 0.0
      %858 = vmatpush1.msra.mxu0 0.0
      %859 = vmatprep.subr.mxu0 0.0
      %860 = vmatpush1.msra.mxu0 0.0
      %861 = vmatprep.subr.mxu0 0.0
      %862 = vmatpush1.msra.mxu0 0.0
      %863 = vmatprep.subr.mxu0 0.0
      %864 = vmatpush1.msra.mxu0 0.0
      %865 = vmatprep.subr.mxu0 0.0
      %866 = vmatpush1.msra.mxu0 0.0
      %867 = vmatprep.subr.mxu0 0.0
      %868 = vmatpush1.msra.mxu0 0.0
      %869 = vmatprep.subr.mxu0 0.0
      %870 = vmatpush1.msra.mxu0 0.0
      %871 = vmatprep.subr.mxu0 0.0
      %872 = vmatpush1.msra.mxu0 0.0
      %873 = vmatprep.subr.mxu0 0.0
      %874 = vmatpush1.msra.mxu0 0.0
      %875 = vmatprep.subr.mxu0 0.0
      %876 = vmatpush1.msra.mxu0 0.0
      %877 = vmatprep.subr.mxu0 0.0
      %878 = vmatpush1.msra.mxu0 0.0
      %879 = vmatprep.subr.mxu0 0.0
      %880 = vmatpush1.msra.mxu0 0.0
      %881 = vmatprep.subr.mxu0 0.0
      %882 = vmatpush1.msra.mxu0 0.0
      %883 = vmatprep.subr.mxu0 0.0
      %884 = vmatpush1.msra.mxu0 0.0
      %885 = vmatprep.subr.mxu0 0.0
      %886 = vmatpush1.msra.mxu0 0.0
      %887 = vmatprep.subr.mxu0 0.0
      %888 = vmatpush1.msra.mxu0 0.0
      %889 = vmatprep.subr.mxu0 0.0
      %890 = vmatpush1.msra.mxu0 0.0
      %891 = vmatprep.subr.mxu0 0.0
      %892 = vmatpush1.msra.mxu0 0.0
      %893 = vmatprep.subr.mxu0 0.0
      %894 = vmatpush1.msra.mxu0 0.0
      %895 = vmatprep.subr.mxu0 0.0
      %896 = vmatpush1.msra.mxu0 0.0
      %897 = vmatprep.subr.mxu0 0.0
      %898 = vmatpush1.msra.mxu0 0.0
      %899 = vmatprep.subr.mxu0 0.0
      %900 = vmatpush1.msra.mxu0 0.0
      %901 = vmatprep.subr.mxu0 0.0
      %902 = vmatpush1.msra.mxu0 0.0
      %903 = vmatprep.subr.mxu0 0.0
      %904 = vmatpush1.msra.mxu0 0.0
      %905 = vmatprep.subr.mxu0 0.0
      %906 = vmatpush1.msra.mxu0 0.0
      %907 = vmatprep.subr.mxu0 0.0
      %908 = vmatpush1.msra.mxu0 0.0
      %909 = vmatprep.subr.mxu0 0.0
      %910 = vmatpush1.msra.mxu0 0.0
      %911 = vmatprep.subr.mxu0 0.0
      %912 = vmatpush1.msra.mxu0 0.0
      %913 = vmatprep.subr.mxu0 0.0
      %914 = vmatpush1.msra.mxu0 0.0
      %915 = vmatprep.subr.mxu0 0.0
      %916 = vmatpush1.msra.mxu0 0.0
      %917 = vmatprep.mubr.f32.mxu0 0.0
      %918 = vmatmul.mubr.f32.gmra.mrb[0].mxu0 %v848
      %v919 = vpop.f32.mrb[0].mxu0
      %v920 = vadd.f32 0.0, %v919
      %v921 = vpop.f32.mrb[0].mxu0
      %922 = vmatprep.mubr.f32.mxu0 0.0
      %923 = vmatmul.mubr.f32.gmra.mrb[0].mxu0 %v851
      %v924 = vpop.f32.mrb[0].mxu0
      %v925 = vadd.f32 0.0, %v924
      %v926 = vpop.f32.mrb[0].mxu0
      %927 = vdwg.mxu0
      %v928 = vadd.f32 %v840, %v920
      %v929 = vadd.f32 %v841, %v925
      %s930 = scalar_lea.vmem %s3, 56
      %v931 = vld [vmem:[%s930] sm:$0xff]
      %v933 = vrot.slane %v842, 1
      %v934 = vrot.slane %v843, 1
      %v935 = vsel %vm323, %v933, %v934
      %v936 = vrot.slane %v844, 1
      %v937 = vsel %vm323, %v934, %v936
      %v938 = vsel %vm329, %v935, 0
      %v940 = vsel %vm329, %v937, 0
      %942 = vmatprep.subr.mxu0 0.0
      %943 = vmatpush1.msra.mxu0 %v931
      %944 = vmatprep.subr.mxu0 0.0
      %945 = vmatpush1.msra.mxu0 0.0
      %946 = vmatprep.subr.mxu0 0.0
      %947 = vmatpush1.msra.mxu0 0.0
      %948 = vmatprep.subr.mxu0 0.0
      %949 = vmatpush1.msra.mxu0 0.0
      %950 = vmatprep.subr.mxu0 0.0
      %951 = vmatpush1.msra.mxu0 0.0
      %952 = vmatprep.subr.mxu0 0.0
      %953 = vmatpush1.msra.mxu0 0.0
      %954 = vmatprep.subr.mxu0 0.0
      %955 = vmatpush1.msra.mxu0 0.0
      %956 = vmatprep.subr.mxu0 0.0
      %957 = vmatpush1.msra.mxu0 0.0
      %958 = vmatprep.subr.mxu0 0.0
      %959 = vmatpush1.msra.mxu0 0.0
      %960 = vmatprep.subr.mxu0 0.0
      %961 = vmatpush1.msra.mxu0 0.0
      %962 = vmatprep.subr.mxu0 0.0
      %963 = vmatpush1.msra.mxu0 0.0
      %964 = vmatprep.subr.mxu0 0.0
      %965 = vmatpush1.msra.mxu0 0.0
      %966 = vmatprep.subr.mxu0 0.0
      %967 = vmatpush1.msra.mxu0 0.0
      %968 = vmatprep.subr.mxu0 0.0
      %969 = vmatpush1.msra.mxu0 0.0
      %970 = vmatprep.subr.mxu0 0.0
      %971 = vmatpush1.msra.mxu0 0.0
      %972 = vmatprep.subr.mxu0 0.0
      %973 = vmatpush1.msra.mxu0 0.0
      %974 = vmatprep.subr.mxu0 0.0
      %975 = vmatpush1.msra.mxu0 0.0
      %976 = vmatprep.subr.mxu0 0.0
      %977 = vmatpush1.msra.mxu0 0.0
      %978 = vmatprep.subr.mxu0 0.0
      %979 = vmatpush1.msra.mxu0 0.0
      %980 = vmatprep.subr.mxu0 0.0
      %981 = vmatpush1.msra.mxu0 0.0
      %982 = vmatprep.subr.mxu0 0.0
      %983 = vmatpush1.msra.mxu0 0.0
      %984 = vmatprep.subr.mxu0 0.0
      %985 = vmatpush1.msra.mxu0 0.0
      %986 = vmatprep.subr.mxu0 0.0
      %987 = vmatpush1.msra.mxu0 0.0
      %988 = vmatprep.subr.mxu0 0.0
      %989 = vmatpush1.msra.mxu0 0.0
      %990 = vmatprep.subr.mxu0 0.0
      %991 = vmatpush1.msra.mxu0 0.0
      %992 = vmatprep.subr.mxu0 0.0
      %993 = vmatpush1.msra.mxu0 0.0
      %994 = vmatprep.subr.mxu0 0.0
      %995 = vmatpush1.msra.mxu0 0.0
      %996 = vmatprep.subr.mxu0 0.0
      %997 = vmatpush1.msra.mxu0 0.0
      %998 = vmatprep.subr.mxu0 0.0
      %999 = vmatpush1.msra.mxu0 0.0
      %1000 = vmatprep.subr.mxu0 0.0
      %1001 = vmatpush1.msra.mxu0 0.0
      %1002 = vmatprep.subr.mxu0 0.0
      %1003 = vmatpush1.msra.mxu0 0.0
      %1004 = vmatprep.subr.mxu0 0.0
      %1005 = vmatpush1.msra.mxu0 0.0
      %1006 = vmatprep.mubr.f32.mxu0 0.0
      %1007 = vmatmul.mubr.f32.gmra.mrb[0].mxu0 %v938
      %v1008 = vpop.f32.mrb[0].mxu0
      %v1009 = vadd.f32 0.0, %v1008
      %v1010 = vpop.f32.mrb[0].mxu0
      %1011 = vmatprep.mubr.f32.mxu0 0.0
      %1012 = vmatmul.mubr.f32.gmra.mrb[0].mxu0 %v940
      %v1013 = vpop.f32.mrb[0].mxu0
      %v1014 = vadd.f32 0.0, %v1013
      %v1015 = vpop.f32.mrb[0].mxu0
      %1016 = vdwg.mxu0
      %v1017 = vadd.f32 %v928, %v1009
      %v1018 = vadd.f32 %v929, %v1014
      %s1019 = scalar_lea.vmem %s3, 64
      %v1020 = vld [vmem:[%s1019] sm:$0xff]
      %v1021 = vrot.slane %v842, 2
      %v1022 = vrot.slane %v843, 2
      %v1023 = vsel %vm490, %v1021, %v1022
      %v1024 = vrot.slane %v844, 2
      %v1025 = vsel %vm490, %v1022, %v1024
      %v1026 = vsel %vm329, %v1023, 0
      %v1028 = vsel %vm329, %v1025, 0
      %1030 = vmatprep.subr.mxu0 0.0
      %1031 = vmatpush1.msra.mxu0 %v1020
      %1032 = vmatprep.subr.mxu0 0.0
      %1033 = vmatpush1.msra.mxu0 0.0
      %1034 = vmatprep.subr.mxu0 0.0
      %1035 = vmatpush1.msra.mxu0 0.0
      %1036 = vmatprep.subr.mxu0 0.0
      %1037 = vmatpush1.msra.mxu0 0.0
      %1038 = vmatprep.subr.mxu0 0.0
      %1039 = vmatpush1.msra.mxu0 0.0
      %1040 = vmatprep.subr.mxu0 0.0
      %1041 = vmatpush1.msra.mxu0 0.0
      %1042 = vmatprep.subr.mxu0 0.0
      %1043 = vmatpush1.msra.mxu0 0.0
      %1044 = vmatprep.subr.mxu0 0.0
      %1045 = vmatpush1.msra.mxu0 0.0
      %1046 = vmatprep.subr.mxu0 0.0
      %1047 = vmatpush1.msra.mxu0 0.0
      %1048 = vmatprep.subr.mxu0 0.0
      %1049 = vmatpush1.msra.mxu0 0.0
      %1050 = vmatprep.subr.mxu0 0.0
      %1051 = vmatpush1.msra.mxu0 0.0
      %1052 = vmatprep.subr.mxu0 0.0
      %1053 = vmatpush1.msra.mxu0 0.0
      %1054 = vmatprep.subr.mxu0 0.0
      %1055 = vmatpush1.msra.mxu0 0.0
      %1056 = vmatprep.subr.mxu0 0.0
      %1057 = vmatpush1.msra.mxu0 0.0
      %1058 = vmatprep.subr.mxu0 0.0
      %1059 = vmatpush1.msra.mxu0 0.0
      %1060 = vmatprep.subr.mxu0 0.0
      %1061 = vmatpush1.msra.mxu0 0.0
      %1062 = vmatprep.subr.mxu0 0.0
      %1063 = vmatpush1.msra.mxu0 0.0
      %1064 = vmatprep.subr.mxu0 0.0
      %1065 = vmatpush1.msra.mxu0 0.0
      %1066 = vmatprep.subr.mxu0 0.0
      %1067 = vmatpush1.msra.mxu0 0.0
      %1068 = vmatprep.subr.mxu0 0.0
      %1069 = vmatpush1.msra.mxu0 0.0
      %1070 = vmatprep.subr.mxu0 0.0
      %1071 = vmatpush1.msra.mxu0 0.0
      %1072 = vmatprep.subr.mxu0 0.0
      %1073 = vmatpush1.msra.mxu0 0.0
      %1074 = vmatprep.subr.mxu0 0.0
      %1075 = vmatpush1.msra.mxu0 0.0
      %1076 = vmatprep.subr.mxu0 0.0
      %1077 = vmatpush1.msra.mxu0 0.0
      %1078 = vmatprep.subr.mxu0 0.0
      %1079 = vmatpush1.msra.mxu0 0.0
      %1080 = vmatprep.subr.mxu0 0.0
      %1081 = vmatpush1.msra.mxu0 0.0
      %1082 = vmatprep.subr.mxu0 0.0
      %1083 = vmatpush1.msra.mxu0 0.0
      %1084 = vmatprep.subr.mxu0 0.0
      %1085 = vmatpush1.msra.mxu0 0.0
      %1086 = vmatprep.subr.mxu0 0.0
      %1087 = vmatpush1.msra.mxu0 0.0
      %1088 = vmatprep.subr.mxu0 0.0
      %1089 = vmatpush1.msra.mxu0 0.0
      %1090 = vmatprep.subr.mxu0 0.0
      %1091 = vmatpush1.msra.mxu0 0.0
      %1092 = vmatprep.subr.mxu0 0.0
      %1093 = vmatpush1.msra.mxu0 0.0
      %1094 = vmatprep.mubr.f32.mxu0 0.0
      %1095 = vmatmul.mubr.f32.gmra.mrb[0].mxu0 %v1026
      %v1096 = vpop.f32.mrb[0].mxu0
      %v1097 = vadd.f32 0.0, %v1096
      %v1098 = vpop.f32.mrb[0].mxu0
      %1099 = vmatprep.mubr.f32.mxu0 0.0
      %1100 = vmatmul.mubr.f32.gmra.mrb[0].mxu0 %v1028
      %v1101 = vpop.f32.mrb[0].mxu0
      %v1102 = vadd.f32 0.0, %v1101
      %v1103 = vpop.f32.mrb[0].mxu0
      %1104 = vdwg.mxu0
      %v1105 = vadd.f32 %v1017, %v1097
      %v1106 = vadd.f32 %v1018, %v1102
      %v1107 = vadd.f32 %v1105, %v1106
      %v1108 = vrot.slane %v1107, 4
      %v1109 = vadd.f32 %v1107, %v1108
      %v1110 = vrot.slane %v1109, 2
      %v1111 = vadd.f32 %v1109, %v1110
      %v1112 = vrot.slane %v1111, 1
      %v1113 = vadd.f32 %v1111, %v1112
      %v1114 = vmul.f32 %v1105, %v1105
      %v1115 = vmul.f32 %v1106, %v1106
      %v1116 = vadd.f32 %v1114, %v1115
      %v1117 = vrot.slane %v1116, 4
      %v1118 = vadd.f32 %v1116, %v1117
      %v1119 = vrot.slane %v1118, 2
      %v1120 = vadd.f32 %v1118, %v1119
      %v1121 = vrot.slane %v1120, 1
      %v1122 = vadd.f32 %v1120, %v1121
      %vm1123 = vcmask 1040384
      %v1124 = vsel %vm1123, %v1113, %v1122
      %1125 = vst [vmem:[%s313] sm:$0x3] %v1124
      %p1126 = scmp.lt.s32.totalorder %s19, 1
      %s1127 = scalar_select %p1126, %s19, 1
      %p1128 = scmp.lt.s32.totalorder %s20, 15
      %s1129 = scalar_select %p1128, %s20, 15
      %s1130 = smul.addr %s1127, 16
      %s1131 = sadd.s32 %s1129, %s1130
      %s1132 = smul.addr %s1131, 2
      %s1133 = scalar_lea.vmem %s4, %s1132
      // Predicated region
      $region37: #{conv_forward.2} parent=35 // pred_check
        %p1134 = pneg %p156
      $region38: #{conv_forward.2} parent=35 // pred_check_branch
        %1136 = sbr.rel (%p1134) target = $region40
      $region39: #{conv_forward.2} parent=35 // pred_region
        _
      $region40: #{conv_forward.2} parent=35 // pred_fallthru
        _
    $region36: #{conv_forward.2} parent=5 // pred_fallthru
      _
    %p1137 = scmp.le.s32.totalorder 2, %s10
    // Predicated region
    $region41: #{conv_forward.2} parent=5 // pred_check
      %p1138 = pneg %p1137
    $region42: #{conv_forward.2} parent=5 // pred_check_branch
      %1140 = sbr.rel (%p1138) target = $region44
    $region43: #{conv_forward.2} parent=5 // pred_region
      %s1141 = ssub.s32 %s10, 2
      // Predicated region
      $region45: #{conv_forward.2} parent=43 // pred_check
        %p1142 = pneg %p162
      $region46: #{conv_forward.2} parent=43 // pred_check_branch
        %1144 = sbr.rel (%p1142) target = $region48
      $region47: #{conv_forward.2} parent=43 // pred_region
        %p1145 = scmp.lt.s32.totalorder %s21, 1
        %s1146 = scalar_select %p1145, %s21, 1
        %p1147 = scmp.lt.s32.totalorder %s22, 15
        %s1148 = scalar_select %p1147, %s22, 15
        %s1149 = smul.addr %s1146, 16
        %s1150 = sadd.s32 %s1148, %s1149
        %s1151 = smul.addr %s1150, 2
        %s1152 = scalar_lea.vmem %s4, %s1151
      $region48: #{conv_forward.2} parent=43 // pred_fallthru
        _
    $region44: #{conv_forward.2} parent=5 // pred_fallthru
      _
  $region6: #{conv_forward.2} parent=0 // loop_footer
    %s14 = sadd.s32 1, %s10
  $region7: #{conv_forward.2} parent=0 // loop_footer_branch
    %9 = sbr.rel target = $region3
  $region8: #{conv_forward.2} parent=0 // loop_exit
    _

// kernel: conv_forward.3
$region0: #{conv_forward.3}
  #allocation0 [shape = 'u32[]', space=smem, size = 0x4, offset = 0x4, fixed_abs, tag = 'smem constant byte address 0x4 - core index']
  #allocation1 [shape = 'u32[144,128]{1,0:T(1,128)}', space=vmem, size = 0x12000, scoped, tag = 'internal scratch']
  %s0 = inlined_call_operand.vmem [shape: f32[2,18,18,8], index: 0, kind: input, shape index: {}, may-alias: {0,1,2}]
  %s1 = inlined_call_operand.vmem [shape: f32[2,18,18,8], index: 1, kind: input, shape index: {}, may-alias: {0,1,2}]
  %s2 = inlined_call_operand.vmem [shape: f32[2,18,18,8], index: 2, kind: input, shape index: {}, may-alias: {0,1,2}]
  %s3 = inlined_call_operand.vmem [shape: f32[9,8,128], index: 3, kind: input, shape index: {}]
  %s4 = inlined_call_operand.vmem [shape: f32[1,128], index: 4, kind: input, shape index: {}]
  %s5 = inlined_call_operand.vmem [shape: f32[1,128], index: 5, kind: input, shape index: {}]
  %s6 = inlined_call_operand.vmem [shape: f32[2,16,16,128], index: 6, kind: output, shape index: {}]
  %s7 = sld [smem:[#allocation0]]
  $region57: #{conv_forward.3} parent=0
    _
  %s9 = ssub.s32 1, %s7
  %s10 = scalar_select 0, %s9, %s7
  loop: start=0, step=1, limit=34
  $region2: #{conv_forward.3} parent=0 // loop_pre_header
    _
  $region3: #{conv_forward.3} parent=0 // loop_header
    %s12 = sphi 0, %s16
    %p13 = scmp.ge.s32.totalorder %s12, 34
    %s19 = sphi 0, %s31
    %s20 = sphi 0, %s27
    %s21 = sphi 0, %s19
    %s22 = sphi 0, %s20
    %s23 = sphi 0, %s21
    %s24 = sphi 0, %s22
    %s36 = sphi 0, %s38
    %s39 = sphi 0, %s36
    %s40 = sphi 0, %s39
    %s56 = sphi 0, %s40
    %s66 = sphi 0, %s68
    %s69 = sphi 0, %s66
    %s70 = sphi 0, %s69
    %s86 = sphi 0, %s70
    %s96 = sphi 0, %s98
    %s99 = sphi 0, %s96
    %s100 = sphi 0, %s99
    %s116 = sphi 0, %s100
    %s120 = sphi 0, %s120
    %s122 = sphi 0, %s120
    %s123 = sphi 0, %s122
    %s137 = sphi 0, %s123
    %s141 = sphi 0, %s141
    %s143 = sphi 0, %s141
    %s144 = sphi 0, %s143
    %s158 = sphi 0, %s144
    %s162 = sphi 0, %s162
    %s164 = sphi 0, %s162
    %s165 = sphi 0, %s164
    %s179 = sphi 0, %s165
    %s187 = sphi 0, %s189
    %s190 = sphi 0, %s187
    %s191 = sphi 0, %s190
    %s207 = sphi 0, %s191
  $region4: #{conv_forward.3} parent=0 // loop_header_branch
    %15 = sbr.rel (%p13) target = $region8
  $region5: #{conv_forward.3} parent=0 // loop_body
    %s17 = ssub.s32 %s12, 1
    %s18 = ssub.s32 %s12, 2
    %s25 = sadd.s32 1, %s20
    %p26 = scmp.ge.s32.totalorder %s25, 16
    %s27 = scalar_select %p26, 0, %s25
    %s28 = sadd.s32 1, %s19
    %s29 = scalar_select %p26, %s28, %s19
    %p30 = scmp.ge.s32.totalorder %s29, 2
    %s31 = scalar_select %p30, 0, %s29
    %s32 = ssub.s32 %s19, %s31
    %s33 = ssub.s32 %s20, %s27
    %s34 = sor.u32 %s32, %s33
    %p35 = scmp.eq.s32.totalorder %s34, 0
    %s37 = sadd.s32 %s36, 1
    %s38 = scalar_select %p35, %s36, %s37
    %p41 = pneg %p35
    %p42 = scmp.eq.s32.totalorder %s12, 31
    %p43 = por %p41, %p42
    %p44 = scmp.ne.s32.totalorder %s36, %s39
    %p45 = scmp.eq.s32.totalorder %s12, 0
    %p46 = por %p44, %p45
    %p47 = scmp.ne.s32.totalorder %s36, %s39
    %p48 = scmp.eq.s32.totalorder %s17, 31
    %p49 = por %p47, %p48
    %p50 = scmp.ne.s32.totalorder %s39, %s40
    %p51 = scmp.eq.s32.totalorder %s17, 0
    %p52 = por %p50, %p51
    %p53 = scmp.ne.s32.totalorder %s39, %s40
    %p54 = scmp.eq.s32.totalorder %s18, 31
    %p55 = por %p53, %p54
    %p57 = scmp.ne.s32.totalorder %s40, %s56
    %p58 = scmp.eq.s32.totalorder %s18, 0
    %p59 = por %p57, %p58
    %s60 = sadd.s32 %s20, 1
    %s61 = sadd.s32 %s27, 1
    %s62 = ssub.s32 %s19, %s31
    %s63 = ssub.s32 %s60, %s61
    %s64 = sor.u32 %s62, %s63
    %p65 = scmp.eq.s32.totalorder %s64, 0
    %s67 = sadd.s32 %s66, 1
    %s68 = scalar_select %p65, %s66, %s67
    %p71 = pneg %p65
    %p72 = scmp.eq.s32.totalorder %s12, 31
    %p73 = por %p71, %p72
    %p74 = scmp.ne.s32.totalorder %s66, %s69
    %p75 = scmp.eq.s32.totalorder %s12, 0
    %p76 = por %p74, %p75
    %p77 = scmp.ne.s32.totalorder %s66, %s69
    %p78 = scmp.eq.s32.totalorder %s17, 31
    %p79 = por %p77, %p78
    %p80 = scmp.ne.s32.totalorder %s69, %s70
    %p81 = scmp.eq.s32.totalorder %s17, 0
    %p82 = por %p80, %p81
    %p83 = scmp.ne.s32.totalorder %s69, %s70
    %p84 = scmp.eq.s32.totalorder %s18, 31
    %p85 = por %p83, %p84
    %p87 = scmp.ne.s32.totalorder %s70, %s86
    %p88 = scmp.eq.s32.totalorder %s18, 0
    %p89 = por %p87, %p88
    %s90 = sadd.s32 %s20, 2
    %s91 = sadd.s32 %s27, 2
    %s92 = ssub.s32 %s19, %s31
    %s93 = ssub.s32 %s90, %s91
    %s94 = sor.u32 %s92, %s93
    %p95 = scmp.eq.s32.totalorder %s94, 0
    %s97 = sadd.s32 %s96, 1
    %s98 = scalar_select %p95, %s96, %s97
    %p101 = pneg %p95
    %p102 = scmp.eq.s32.totalorder %s12, 31
    %p103 = por %p101, %p102
    %p104 = scmp.ne.s32.totalorder %s96, %s99
    %p105 = scmp.eq.s32.totalorder %s12, 0
    %p106 = por %p104, %p105
    %p107 = scmp.ne.s32.totalorder %s96, %s99
    %p108 = scmp.eq.s32.totalorder %s17, 31
    %p109 = por %p107, %p108
    %p110 = scmp.ne.s32.totalorder %s99, %s100
    %p111 = scmp.eq.s32.totalorder %s17, 0
    %p112 = por %p110, %p111
    %p113 = scmp.ne.s32.totalorder %s99, %s100
    %p114 = scmp.eq.s32.totalorder %s18, 31
    %p115 = por %p113, %p114
    %p117 = scmp.ne.s32.totalorder %s100, %s116
    %p118 = scmp.eq.s32.totalorder %s18, 0
    %p119 = por %p117, %p118
    %s121 = sadd.s32 %s120, 1
    %p124 = scmp.eq.s32.totalorder %s12, 31
    %p125 = scmp.ne.s32.totalorder %s120, %s122
    %p126 = scmp.eq.s32.totalorder %s12, 0
    %p127 = por %p125, %p126
    %p128 = scmp.ne.s32.totalorder %s120, %s122
    %p129 = scmp.eq.s32.totalorder %s17, 31
    %p130 = por %p128, %p129
    %p131 = scmp.ne.s32.totalorder %s122, %s123
    %p132 = scmp.eq.s32.totalorder %s17, 0
    %p133 = por %p131, %p132
    %p134 = scmp.ne.s32.totalorder %s122, %s123
    %p135 = scmp.eq.s32.totalorder %s18, 31
    %p136 = por %p134, %p135
    %p138 = scmp.ne.s32.totalorder %s123, %s137
    %p139 = scmp.eq.s32.totalorder %s18, 0
    %p140 = por %p138, %p139
    %s142 = sadd.s32 %s141, 1
    %p145 = scmp.eq.s32.totalorder %s12, 31
    %p146 = scmp.ne.s32.totalorder %s141, %s143
    %p147 = scmp.eq.s32.totalorder %s12, 0
    %p148 = por %p146, %p147
    %p149 = scmp.ne.s32.totalorder %s141, %s143
    %p150 = scmp.eq.s32.totalorder %s17, 31
    %p151 = por %p149, %p150
    %p152 = scmp.ne.s32.totalorder %s143, %s144
    %p153 = scmp.eq.s32.totalorder %s17, 0
    %p154 = por %p152, %p153
    %p155 = scmp.ne.s32.totalorder %s143, %s144
    %p156 = scmp.eq.s32.totalorder %s18, 31
    %p157 = por %p155, %p156
    %p159 = scmp.ne.s32.totalorder %s144, %s158
    %p160 = scmp.eq.s32.totalorder %s18, 0
    %p161 = por %p159, %p160
    %s163 = sadd.s32 %s162, 1
    %p166 = scmp.eq.s32.totalorder %s12, 31
    %p167 = scmp.ne.s32.totalorder %s162, %s164
    %p168 = scmp.eq.s32.totalorder %s12, 0
    %p169 = por %p167, %p168
    %p170 = scmp.ne.s32.totalorder %s162, %s164
    %p171 = scmp.eq.s32.totalorder %s17, 31
    %p172 = por %p170, %p171
    %p173 = scmp.ne.s32.totalorder %s164, %s165
    %p174 = scmp.eq.s32.totalorder %s17, 0
    %p175 = por %p173, %p174
    %p176 = scmp.ne.s32.totalorder %s164, %s165
    %p177 = scmp.eq.s32.totalorder %s18, 31
    %p178 = por %p176, %p177
    %p180 = scmp.ne.s32.totalorder %s165, %s179
    %p181 = scmp.eq.s32.totalorder %s18, 0
    %p182 = por %p180, %p181
    %s183 = ssub.s32 %s19, %s31
    %s184 = ssub.s32 %s20, %s27
    %s185 = sor.u32 %s183, %s184
    %p186 = scmp.eq.s32.totalorder %s185, 0
    %s188 = sadd.s32 %s187, 1
    %s189 = scalar_select %p186, %s187, %s188
    %p192 = pneg %p186
    %p193 = scmp.eq.s32.totalorder %s12, 31
    %p194 = por %p192, %p193
    %p195 = scmp.ne.s32.totalorder %s187, %s190
    %p196 = scmp.eq.s32.totalorder %s12, 0
    %p197 = por %p195, %p196
    %p198 = scmp.ne.s32.totalorder %s187, %s190
    %p199 = scmp.eq.s32.totalorder %s17, 31
    %p200 = por %p198, %p199
    %p201 = scmp.ne.s32.totalorder %s190, %s191
    %p202 = scmp.eq.s32.totalorder %s17, 0
    %p203 = por %p201, %p202
    %p204 = scmp.ne.s32.totalorder %s190, %s191
    %p205 = scmp.eq.s32.totalorder %s18, 31
    %p206 = por %p204, %p205
    %p208 = scmp.ne.s32.totalorder %s191, %s207
    %p209 = scmp.eq.s32.totalorder %s18, 0
    %p210 = por %p208, %p209
    %p211 = scmp.le.s32.totalorder 1, %s12
    %p212 = scmp.lt.s32.totalorder %s12, 33
    %p213 = pnand %p211, %p212
    %p214 = pneg %p213
    // Predicated region
    $region9: #{conv_forward.3} parent=5 // pred_check
      _
    $region10: #{conv_forward.3} parent=5 // pred_check_branch
      %216 = sbr.rel (%p213) target = $region12
    $region11: #{conv_forward.3} parent=5 // pred_region
      %s217 = ssub.s32 %s12, 1
      // Predicated region
      $region13: #{conv_forward.3} parent=11 // pred_check
        %p218 = pneg %p133
      $region14: #{conv_forward.3} parent=11 // pred_check_branch
        %220 = sbr.rel (%p218) target = $region16
      $region15: #{conv_forward.3} parent=11 // pred_region
        _
      $region16: #{conv_forward.3} parent=11 // pred_fallthru
        _
      // Predicated region
      $region17: #{conv_forward.3} parent=11 // pred_check
        %p221 = pneg %p154
      $region18: #{conv_forward.3} parent=11 // pred_check_branch
        %223 = sbr.rel (%p221) target = $region20
      $region19: #{conv_forward.3} parent=11 // pred_region
        _
      $region20: #{conv_forward.3} parent=11 // pred_fallthru
        _
      // Predicated region
      $region21: #{conv_forward.3} parent=11 // pred_check
        %p224 = pneg %p175
      $region22: #{conv_forward.3} parent=11 // pred_check_branch
        %226 = sbr.rel (%p224) target = $region24
      $region23: #{conv_forward.3} parent=11 // pred_region
        _
      $region24: #{conv_forward.3} parent=11 // pred_fallthru
        _
    $region12: #{conv_forward.3} parent=5 // pred_fallthru
      _
    %p227 = scmp.lt.s32.totalorder %s12, 32
    // Predicated region
    $region25: #{conv_forward.3} parent=5 // pred_check
      %p228 = pneg %p227
    $region26: #{conv_forward.3} parent=5 // pred_check_branch
      %230 = sbr.rel (%p228) target = $region28
    $region27: #{conv_forward.3} parent=5 // pred_region
      // Predicated region
      $region29: #{conv_forward.3} parent=27 // pred_check
        %p231 = pneg %p46
      $region30: #{conv_forward.3} parent=27 // pred_check_branch
        %233 = sbr.rel (%p231) target = $region32
      $region31: #{conv_forward.3} parent=27 // pred_region
        %p234 = scmp.lt.s32.totalorder %s19, 1
        %s235 = scalar_select %p234, %s19, 1
        %p236 = scmp.lt.s32.totalorder %s20, 17
        %s237 = scalar_select %p236, %s20, 17
        %s238 = smul.addr %s237, 3
        %s239 = smul.addr %s235, 54
        %s240 = sadd.s32 %s238, %s239
        %s241 = smul.addr %s240, 8
        %s242 = scalar_lea.vmem %s0, %s241
      $region32: #{conv_forward.3} parent=27 // pred_fallthru
        _
      // Predicated region
      $region33: #{conv_forward.3} parent=27 // pred_check
        %p243 = pneg %p76
      $region34: #{conv_forward.3} parent=27 // pred_check_branch
        %245 = sbr.rel (%p243) target = $region36
      $region35: #{conv_forward.3} parent=27 // pred_region
        %s246 = sadd.s32 %s20, 1
        %p247 = scmp.lt.s32.totalorder %s19, 1
        %s248 = scalar_select %p247, %s19, 1
        %p249 = scmp.lt.s32.totalorder %s246, 17
        %s250 = scalar_select %p249, %s246, 17
        %s251 = smul.addr %s250, 3
        %s252 = smul.addr %s248, 54
        %s253 = sadd.s32 %s251, %s252
        %s254 = smul.addr %s253, 8
        %s255 = scalar_lea.vmem %s1, %s254
        %s256 = sadd.s32 %s20, 1
      $region36: #{conv_forward.3} parent=27 // pred_fallthru
        _
      // Predicated region
      $region37: #{conv_forward.3} parent=27 // pred_check
        %p257 = pneg %p106
      $region38: #{conv_forward.3} parent=27 // pred_check_branch
        %259 = sbr.rel (%p257) target = $region40
      $region39: #{conv_forward.3} parent=27 // pred_region
        %s260 = sadd.s32 %s20, 2
        %p261 = scmp.lt.s32.totalorder %s19, 1
        %s262 = scalar_select %p261, %s19, 1
        %p263 = scmp.lt.s32.totalorder %s260, 17
        %s264 = scalar_select %p263, %s260, 17
        %s265 = smul.addr %s264, 3
        %s266 = smul.addr %s262, 54
        %s267 = sadd.s32 %s265, %s266
        %s268 = smul.addr %s267, 8
        %s269 = scalar_lea.vmem %s2, %s268
        %s270 = sadd.s32 %s20, 2
      $region40: #{conv_forward.3} parent=27 // pred_fallthru
        _
    $region28: #{conv_forward.3} parent=5 // pred_fallthru
      _
    %p271 = scmp.le.s32.totalorder 1, %s12
    %p272 = scmp.lt.s32.totalorder %s12, 33
    %p273 = pnand %p271, %p272
    %p274 = pneg %p273
    // Predicated region
    $region41: #{conv_forward.3} parent=5 // pred_check
      _
    $region42: #{conv_forward.3} parent=5 // pred_check_branch
      %276 = sbr.rel (%p273) target = $region44
    $region43: #{conv_forward.3} parent=5 // pred_region
      %s277 = ssub.s32 %s12, 1
      %p278 = scmp.lt.s32.totalorder %s21, 1
      %s279 = scalar_select %p278, %s21, 1
      %p280 = scmp.lt.s32.totalorder %s22, 17
      %s281 = scalar_select %p280, %s22, 17
      %s282 = smul.addr %s281, 3
      %s283 = smul.addr %s279, 54
      %s284 = sadd.s32 %s282, %s283
      %s285 = smul.addr %s284, 8
      %s286 = scalar_lea.vmem %s0, %s285
      %p287 = pneg %p52
      %p288 = pneg %p49
      %s289 = sadd.s32 %s22, 1
      %p290 = scmp.lt.s32.totalorder %s21, 1
      %s291 = scalar_select %p290, %s21, 1
      %p292 = scmp.lt.s32.totalorder %s289, 17
      %s293 = scalar_select %p292, %s289, 17
      %s294 = smul.addr %s293, 3
      %s295 = smul.addr %s291, 54
      %s296 = sadd.s32 %s294, %s295
      %s297 = smul.addr %s296, 8
      %s298 = scalar_lea.vmem %s1, %s297
      %p299 = pneg %p82
      %p300 = pneg %p79
      %s301 = sadd.s32 %s22, 2
      %p302 = scmp.lt.s32.totalorder %s21, 1
      %s303 = scalar_select %p302, %s21, 1
      %p304 = scmp.lt.s32.totalorder %s301, 17
      %s305 = scalar_select %p304, %s301, 17
      %s306 = smul.addr %s305, 3
      %s307 = smul.addr %s303, 54
      %s308 = sadd.s32 %s306, %s307
      %s309 = smul.addr %s308, 8
      %s310 = scalar_lea.vmem %s2, %s309
      %p311 = pneg %p112
      %p312 = pneg %p109
      %p313 = pneg %p133
      %p314 = pneg %p130
      %p315 = pneg %p154
      %p316 = pneg %p151
      %p317 = pneg %p175
      %p318 = pneg %p172
      %p319 = pneg %p203
      %p320 = pneg %p200
      %p321 = scmp.lt.s32.totalorder %s21, 1
      %s322 = scalar_select %p321, %s21, 1
      %p323 = scmp.lt.s32.totalorder %s22, 15
      %s324 = scalar_select %p323, %s22, 15
      %s325 = smul.addr %s324, 2
      %s326 = smul.addr %s322, 32
      %s327 = sadd.s32 %s325, %s326
      %s328 = smul.addr %s327, 8
      %s329 = scalar_lea.vmem %s6, %s328
      %p330 = scmp.lt.s32.totalorder %s21, 1
      %s331 = scalar_select %p330, %s21, 1
      %p332 = scmp.lt.s32.totalorder %s22, 17
      %s333 = scalar_select %p332, %s22, 17
      %s334 = smul.addr %s333, 3
      %s335 = smul.addr %s331, 54
      %s336 = sadd.s32 %s334, %s335
      %s337 = smul.addr %s336, 8
      %s338 = scalar_lea.vmem %s0, %s337
      %s339 = sadd.s32 %s22, 1
      %p340 = scmp.lt.s32.totalorder %s21, 1
      %s341 = scalar_select %p340, %s21, 1
      %p342 = scmp.lt.s32.totalorder %s339, 17
      %s343 = scalar_select %p342, %s339, 17
      %s344 = smul.addr %s343, 3
      %s345 = smul.addr %s341, 54
      %s346 = sadd.s32 %s344, %s345
      %s347 = smul.addr %s346, 8
      %s348 = scalar_lea.vmem %s1, %s347
      %s349 = sadd.s32 %s22, 1
      %s350 = sadd.s32 %s22, 2
      %p351 = scmp.lt.s32.totalorder %s21, 1
      %s352 = scalar_select %p351, %s21, 1
      %p353 = scmp.lt.s32.totalorder %s350, 17
      %s354 = scalar_select %p353, %s350, 17
      %s355 = smul.addr %s354, 3
      %s356 = smul.addr %s352, 54
      %s357 = sadd.s32 %s355, %s356
      %s358 = smul.addr %s357, 8
      %s359 = scalar_lea.vmem %s2, %s358
      %s360 = sadd.s32 %s22, 2
      %p361 = scmp.lt.s32.totalorder %s21, 1
      %s362 = scalar_select %p361, %s21, 1
      %p363 = scmp.lt.s32.totalorder %s22, 15
      %s364 = scalar_select %p363, %s22, 15
      %s365 = smul.addr %s364, 2
      %s366 = smul.addr %s362, 32
      %s367 = sadd.s32 %s365, %s366
      %s368 = smul.addr %s367, 8
      %s369 = scalar_lea.vmem %s6, %s368
      %v370 = vld [vmem:[%s338] sm:$0xff]
      %v371 = vld [vmem:[%s338 + $0x8] sm:$0xff]
      %v372 = vld [vmem:[%s338 + $0x10] sm:$0x3]
      %v373 = vld [vmem:[%s3] sm:$0xff]
      %s374 = scalar_lea.vmem %s3, 8
      %v375 = vld [vmem:[%s374] sm:$0xff]
      %vm379 = vcmask 1046528
      %v380 = vrot.slane %v370, 1
      %v381 = vrot.slane %v371, 1
      %v382 = vsel %vm379, %v380, %v381
      %v383 = vrot.slane %v372, 1
      %v384 = vsel %vm379, %v381, %v383
      %vm385 = vcmask 64512
      %v386 = vsel %vm385, %v382, 0
      %v388 = vsel %vm385, %v384, 0
      %390 = vmatprep.subr.mxu0 0.0
      %391 = vmatpush1.msra.mxu0 %v375
      %392 = vmatprep.subr.mxu0 0.0
      %393 = vmatpush1.msra.mxu0 0.0
      %394 = vmatprep.subr.mxu0 0.0
      %395 = vmatpush1.msra.mxu0 0.0
      %396 = vmatprep.subr.mxu0 0.0
      %397 = vmatpush1.msra.mxu0 0.0
      %398 = vmatprep.subr.mxu0 0.0
      %399 = vmatpush1.msra.mxu0 0.0
      %400 = vmatprep.subr.mxu0 0.0
      %401 = vmatpush1.msra.mxu0 0.0
      %402 = vmatprep.subr.mxu0 0.0
      %403 = vmatpush1.msra.mxu0 0.0
      %404 = vmatprep.subr.mxu0 0.0
      %405 = vmatpush1.msra.mxu0 0.0
      %406 = vmatprep.subr.mxu0 0.0
      %407 = vmatpush1.msra.mxu0 0.0
      %408 = vmatprep.subr.mxu0 0.0
      %409 = vmatpush1.msra.mxu0 0.0
      %410 = vmatprep.subr.mxu0 0.0
      %411 = vmatpush1.msra.mxu0 0.0
      %412 = vmatprep.subr.mxu0 0.0
      %413 = vmatpush1.msra.mxu0 0.0
      %414 = vmatprep.subr.mxu0 0.0
      %415 = vmatpush1.msra.mxu0 0.0
      %416 = vmatprep.subr.mxu0 0.0
      %417 = vmatpush1.msra.mxu0 0.0
      %418 = vmatprep.subr.mxu0 0.0
      %419 = vmatpush1.msra.mxu0 0.0
      %420 = vmatprep.subr.mxu0 0.0
      %421 = vmatpush1.msra.mxu0 0.0
      %422 = vmatprep.subr.mxu0 0.0
      %423 = vmatpush1.msra.mxu0 0.0
      %424 = vmatprep.subr.mxu0 0.0
      %425 = vmatpush1.msra.mxu0 0.0
      %426 = vmatprep.subr.mxu0 0.0
      %427 = vmatpush1.msra.mxu0 0.0
      %428 = vmatprep.subr.mxu0 0.0
      %429 = vmatpush1.msra.mxu0 0.0
      %430 = vmatprep.subr.mxu0 0.0
      %431 = vmatpush1.msra.mxu0 0.0
      %432 = vmatprep.subr.mxu0 0.0
      %433 = vmatpush1.msra.mxu0 0.0
      %434 = vmatprep.subr.mxu0 0.0
      %435 = vmatpush1.msra.mxu0 0.0
      %436 = vmatprep.subr.mxu0 0.0
      %437 = vmatpush1.msra.mxu0 0.0
      %438 = vmatprep.subr.mxu0 0.0
      %439 = vmatpush1.msra.mxu0 0.0
      %440 = vmatprep.subr.mxu0 0.0
      %441 = vmatpush1.msra.mxu0 0.0
      %442 = vmatprep.subr.mxu0 0.0
      %443 = vmatpush1.msra.mxu0 0.0
      %444 = vmatprep.subr.mxu0 0.0
      %445 = vmatpush1.msra.mxu0 0.0
      %446 = vmatprep.subr.mxu0 0.0
      %447 = vmatpush1.msra.mxu0 0.0
      %448 = vmatprep.subr.mxu0 0.0
      %449 = vmatpush1.msra.mxu0 0.0
      %450 = vmatprep.subr.mxu0 0.0
      %451 = vmatpush1.msra.mxu0 0.0
      %452 = vmatprep.subr.mxu0 0.0
      %453 = vmatpush1.msra.mxu0 0.0
      %454 = vmatprep.mubr.f32.mxu0 0.0
      %455 = vmatmul.mubr.f32.gmra.mrb[0].mxu0 %v386
      %v456 = vpop.f32.mrb[0].mxu0
      %v457 = vadd.f32 0.0, %v456
      %v458 = vpop.f32.mrb[0].mxu0
      %459 = vmatprep.mubr.f32.mxu0 0.0
      %460 = vmatmul.mubr.f32.gmra.mrb[0].mxu0 %v388
      %v461 = vpop.f32.mrb[0].mxu0
      %v462 = vadd.f32 0.0, %v461
      %v463 = vpop.f32.mrb[0].mxu0
      %464 = vdwg.mxu0
      %v465 = vsel %vm385, %v370, 0
      %v467 = vsel %vm385, %v371, 0
      %469 = vmatprep.subr.mxu0 0.0
      %470 = vmatpush1.msra.mxu0 %v373
      %471 = vmatprep.subr.mxu0 0.0
      %472 = vmatpush1.msra.mxu0 0.0
      %473 = vmatprep.subr.mxu0 0.0
      %474 = vmatpush1.msra.mxu0 0.0
      %475 = vmatprep.subr.mxu0 0.0
      %476 = vmatpush1.msra.mxu0 0.0
      %477 = vmatprep.subr.mxu0 0.0
      %478 = vmatpush1.msra.mxu0 0.0
      %479 = vmatprep.subr.mxu0 0.0
      %480 = vmatpush1.msra.mxu0 0.0
      %481 = vmatprep.subr.mxu0 0.0
      %482 = vmatpush1.msra.mxu0 0.0
      %483 = vmatprep.subr.mxu0 0.0
      %484 = vmatpush1.msra.mxu0 0.0
      %485 = vmatprep.subr.mxu0 0.0
      %486 = vmatpush1.msra.mxu0 0.0
      %487 = vmatprep.subr.mxu0 0.0
      %488 = vmatpush1.msra.mxu0 0.0
      %489 = vmatprep.subr.mxu0 0.0
      %490 = vmatpush1.msra.mxu0 0.0
      %491 = vmatprep.subr.mxu0 0.0
      %492 = vmatpush1.msra.mxu0 0.0
      %493 = vmatprep.subr.mxu0 0.0
      %494 = vmatpush1.msra.mxu0 0.0
      %495 = vmatprep.subr.mxu0 0.0
      %496 = vmatpush1.msra.mxu0 0.0
      %497 = vmatprep.subr.mxu0 0.0
      %498 = vmatpush1.msra.mxu0 0.0
      %499 = vmatprep.subr.mxu0 0.0
      %500 = vmatpush1.msra.mxu0 0.0
      %501 = vmatprep.subr.mxu0 0.0
      %502 = vmatpush1.msra.mxu0 0.0
      %503 = vmatprep.subr.mxu0 0.0
      %504 = vmatpush1.msra.mxu0 0.0
      %505 = vmatprep.subr.mxu0 0.0
      %506 = vmatpush1.msra.mxu0 0.0
      %507 = vmatprep.subr.mxu0 0.0
      %508 = vmatpush1.msra.mxu0 0.0
      %509 = vmatprep.subr.mxu0 0.0
      %510 = vmatpush1.msra.mxu0 0.0
      %511 = vmatprep.subr.mxu0 0.0
      %512 = vmatpush1.msra.mxu0 0.0
      %513 = vmatprep.subr.mxu0 0.0
      %514 = vmatpush1.msra.mxu0 0.0
      %515 = vmatprep.subr.mxu0 0.0
      %516 = vmatpush1.msra.mxu0 0.0
      %517 = vmatprep.subr.mxu0 0.0
      %518 = vmatpush1.msra.mxu0 0.0
      %519 = vmatprep.subr.mxu0 0.0
      %520 = vmatpush1.msra.mxu0 0.0
      %521 = vmatprep.subr.mxu0 0.0
      %522 = vmatpush1.msra.mxu0 0.0
      %523 = vmatprep.subr.mxu0 0.0
      %524 = vmatpush1.msra.mxu0 0.0
      %525 = vmatprep.subr.mxu0 0.0
      %526 = vmatpush1.msra.mxu0 0.0
      %527 = vmatprep.subr.mxu0 0.0
      %528 = vmatpush1.msra.mxu0 0.0
      %529 = vmatprep.subr.mxu0 0.0
      %530 = vmatpush1.msra.mxu0 0.0
      %531 = vmatprep.subr.mxu0 0.0
      %532 = vmatpush1.msra.mxu0 0.0
      %533 = vmatprep.mubr.f32.mxu0 0.0
      %534 = vmatmul.mubr.f32.gmra.mrb[0].mxu0 %v465
      %v535 = vpop.f32.mrb[0].mxu0
      %v536 = vadd.f32 %v457, %v535
      %v537 = vpop.f32.mrb[0].mxu0
      %538 = vmatprep.mubr.f32.mxu0 0.0
      %539 = vmatmul.mubr.f32.gmra.mrb[0].mxu0 %v467
      %v540 = vpop.f32.mrb[0].mxu0
      %v541 = vadd.f32 %v462, %v540
      %v542 = vpop.f32.mrb[0].mxu0
      %543 = vdwg.mxu0
      %s544 = scalar_lea.vmem %s3, 16
      %v545 = vld [vmem:[%s544] sm:$0xff]
      %vm546 = vcmask 1045504
      %v547 = vrot.slane %v370, 2
      %v548 = vrot.slane %v371, 2
      %v549 = vsel %vm546, %v547, %v548
      %v550 = vrot.slane %v372, 2
      %v551 = vsel %vm546, %v548, %v550
      %v552 = vsel %vm385, %v549, 0
      %v554 = vsel %vm385, %v551, 0
      %556 = vmatprep.subr.mxu0 0.0
      %557 = vmatpush1.msra.mxu0 %v545
      %558 = vmatprep.subr.mxu0 0.0
      %559 = vmatpush1.msra.mxu0 0.0
      %560 = vmatprep.subr.mxu0 0.0
      %561 = vmatpush1.msra.mxu0 0.0
      %562 = vmatprep.subr.mxu0 0.0
      %563 = vmatpush1.msra.mxu0 0.0
      %564 = vmatprep.subr.mxu0 0.0
      %565 = vmatpush1.msra.mxu0 0.0
      %566 = vmatprep.subr.mxu0 0.0
      %567 = vmatpush1.msra.mxu0 0.0
      %568 = vmatprep.subr.mxu0 0.0
      %569 = vmatpush1.msra.mxu0 0.0
      %570 = vmatprep.subr.mxu0 0.0
      %571 = vmatpush1.msra.mxu0 0.0
      %572 = vmatprep.subr.mxu0 0.0
      %573 = vmatpush1.msra.mxu0 0.0
      %574 = vmatprep.subr.mxu0 0.0
      %575 = vmatpush1.msra.mxu0 0.0
      %576 = vmatprep.subr.mxu0 0.0
      %577 = vmatpush1.msra.mxu0 0.0
      %578 = vmatprep.subr.mxu0 0.0
      %579 = vmatpush1.msra.mxu0 0.0
      %580 = vmatprep.subr.mxu0 0.0
      %581 = vmatpush1.msra.mxu0 0.0
      %582 = vmatprep.subr.mxu0 0.0
      %583 = vmatpush1.msra.mxu0 0.0
      %584 = vmatprep.subr.mxu0 0.0
      %585 = vmatpush1.msra.mxu0 0.0
      %586 = vmatprep.subr.mxu0 0.0
      %587 = vmatpush1.msra.mxu0 0.0
      %588 = vmatprep.subr.mxu0 0.0
      %589 = vmatpush1.msra.mxu0 0.0
      %590 = vmatprep.subr.mxu0 0.0
      %591 = vmatpush1.msra.mxu0 0.0
      %592 = vmatprep.subr.mxu0 0.0
      %593 = vmatpush1.msra.mxu0 0.0
      %594 = vmatprep.subr.mxu0 0.0
      %595 = vmatpush1.msra.mxu0 0.0
      %596 = vmatprep.subr.mxu0 0.0
      %597 = vmatpush1.msra.mxu0 0.0
      %598 = vmatprep.subr.mxu0 0.0
      %599 = vmatpush1.msra.mxu0 0.0
      %600 = vmatprep.subr.mxu0 0.0
      %601 = vmatpush1.msra.mxu0 0.0
      %602 = vmatprep.subr.mxu0 0.0
      %603 = vmatpush1.msra.mxu0 0.0
      %604 = vmatprep.subr.mxu0 0.0
      %605 = vmatpush1.msra.mxu0 0.0
      %606 = vmatprep.subr.mxu0 0.0
      %607 = vmatpush1.msra.mxu0 0.0
      %608 = vmatprep.subr.mxu0 0.0
      %609 = vmatpush1.msra.mxu0 0.0
      %610 = vmatprep.subr.mxu0 0.0
      %611 = vmatpush1.msra.mxu0 0.0
      %612 = vmatprep.subr.mxu0 0.0
      %613 = vmatpush1.msra.mxu0 0.0
      %614 = vmatprep.subr.mxu0 0.0
      %615 = vmatpush1.msra.mxu0 0.0
      %616 = vmatprep.subr.mxu0 0.0
      %617 = vmatpush1.msra.mxu0 0.0
      %618 = vmatprep.subr.mxu0 0.0
      %619 = vmatpush1.msra.mxu0 0.0
      %620 = vmatprep.mubr.f32.mxu0 0.0
      %621 = vmatmul.mubr.f32.gmra.mrb[0].mxu0 %v552
      %v622 = vpop.f32.mrb[0].mxu0
      %v623 = vadd.f32 0.0, %v622
      %v624 = vpop.f32.mrb[0].mxu0
      %625 = vmatprep.mubr.f32.mxu0 0.0
      %626 = vmatmul.mubr.f32.gmra.mrb[0].mxu0 %v554
      %v627 = vpop.f32.mrb[0].mxu0
      %v628 = vadd.f32 0.0, %v627
      %v629 = vpop.f32.mrb[0].mxu0
      %630 = vdwg.mxu0
      %v631 = vadd.f32 %v536, %v623
      %v632 = vadd.f32 %v541, %v628
      %v633 = vld [vmem:[%s348] sm:$0xff]
      %v634 = vld [vmem:[%s348 + $0x8] sm:$0xff]
      %v635 = vld [vmem:[%s348 + $0x10] sm:$0x3]
      %s636 = scalar_lea.vmem %s3, 24
      %v637 = vld [vmem:[%s636] sm:$0xff]
      %v639 = vsel %vm385, %v633, 0
      %v642 = vsel %vm385, %v634, 0
      %644 = vmatprep.subr.mxu0 0.0
      %645 = vmatpush1.msra.mxu0 %v637
      %646 = vmatprep.subr.mxu0 0.0
      %647 = vmatpush1.msra.mxu0 0.0
      %648 = vmatprep.subr.mxu0 0.0
      %649 = vmatpush1.msra.mxu0 0.0
      %650 = vmatprep.subr.mxu0 0.0
      %651 = vmatpush1.msra.mxu0 0.0
      %652 = vmatprep.subr.mxu0 0.0
      %653 = vmatpush1.msra.mxu0 0.0
      %654 = vmatprep.subr.mxu0 0.0
      %655 = vmatpush1.msra.mxu0 0.0
      %656 = vmatprep.subr.mxu0 0.0
      %657 = vmatpush1.msra.mxu0 0.0
      %658 = vmatprep.subr.mxu0 0.0
      %659 = vmatpush1.msra.mxu0 0.0
      %660 = vmatprep.subr.mxu0 0.0
      %661 = vmatpush1.msra.mxu0 0.0
      %662 = vmatprep.subr.mxu0 0.0
      %663 = vmatpush1.msra.mxu0 0.0
      %664 = vmatprep.subr.mxu0 0.0
      %665 = vmatpush1.msra.mxu0 0.0
      %666 = vmatprep.subr.mxu0 0.0
      %667 = vmatpush1.msra.mxu0 0.0
      %668 = vmatprep.subr.mxu0 0.0
      %669 = vmatpush1.msra.mxu0 0.0
      %670 = vmatprep.subr.mxu0 0.0
      %671 = vmatpush1.msra.mxu0 0.0
      %672 = vmatprep.subr.mxu0 0.0
      %673 = vmatpush1.msra.mxu0 0.0
      %674 = vmatprep.subr.mxu0 0.0
      %675 = vmatpush1.msra.mxu0 0.0
      %676 = vmatprep.subr.mxu0 0.0
      %677 = vmatpush1.msra.mxu0 0.0
      %678 = vmatprep.subr.mxu0 0.0
      %679 = vmatpush1.msra.mxu0 0.0
      %680 = vmatprep.subr.mxu0 0.0
      %681 = vmatpush1.msra.mxu0 0.0
      %682 = vmatprep.subr.mxu0 0.0
      %683 = vmatpush1.msra.mxu0 0.0
      %684 = vmatprep.subr.mxu0 0.0
      %685 = vmatpush1.msra.mxu0 0.0
      %686 = vmatprep.subr.mxu0 0.0
      %687 = vmatpush1.msra.mxu0 0.0
      %688 = vmatprep.subr.mxu0 0.0
      %689 = vmatpush1.msra.mxu0 0.0
      %690 = vmatprep.subr.mxu0 0.0
      %691 = vmatpush1.msra.mxu0 0.0
      %692 = vmatprep.subr.mxu0 0.0
      %693 = vmatpush1.msra.mxu0 0.0
      %694 = vmatprep.subr.mxu0 0.0
      %695 = vmatpush1.msra.mxu0 0.0
      %696 = vmatprep.subr.mxu0 0.0
      %697 = vmatpush1.msra.mxu0 0.0
      %698 = vmatprep.subr.mxu0 0.0
      %699 = vmatpush1.msra.mxu0 0.0
      %700 = vmatprep.subr.mxu0 0.0
      %701 = vmatpush1.msra.mxu0 0.0
      %702 = vmatprep.subr.mxu0 0.0
      %703 = vmatpush1.msra.mxu0 0.0
      %704 = vmatprep.subr.mxu0 0.0
      %705 = vmatpush1.msra.mxu0 0.0
      %706 = vmatprep.subr.mxu0 0.0
      %707 = vmatpush1.msra.mxu0 0.0
      %708 = vmatprep.mubr.f32.mxu0 0.0
      %709 = vmatmul.mubr.f32.gmra.mrb[0].mxu0 %v639
      %v710 = vpop.f32.mrb[0].mxu0
      %v711 = vadd.f32 0.0, %v710
      %v712 = vpop.f32.mrb[0].mxu0
      %713 = vmatprep.mubr.f32.mxu0 0.0
      %714 = vmatmul.mubr.f32.gmra.mrb[0].mxu0 %v642
      %v715 = vpop.f32.mrb[0].mxu0
      %v716 = vadd.f32 0.0, %v715
      %v717 = vpop.f32.mrb[0].mxu0
      %718 = vdwg.mxu0
      %v719 = vadd.f32 %v631, %v711
      %v720 = vadd.f32 %v632, %v716
      %s721 = scalar_lea.vmem %s3, 32
      %v722 = vld [vmem:[%s721] sm:$0xff]
      %v724 = vrot.slane %v633, 1
      %v725 = vrot.slane %v634, 1
      %v726 = vsel %vm379, %v724, %v725
      %v727 = vrot.slane %v635, 1
      %v728 = vsel %vm379, %v725, %v727
      %v729 = vsel %vm385, %v726, 0
      %v731 = vsel %vm385, %v728, 0
      %733 = vmatprep.subr.mxu0 0.0
      %734 = vmatpush1.msra.mxu0 %v722
      %735 = vmatprep.subr.mxu0 0.0
      %736 = vmatpush1.msra.mxu0 0.0
      %737 = vmatprep.subr.mxu0 0.0
      %738 = vmatpush1.msra.mxu0 0.0
      %739 = vmatprep.subr.mxu0 0.0
      %740 = vmatpush1.msra.mxu0 0.0
      %741 = vmatprep.subr.mxu0 0.0
      %742 = vmatpush1.msra.mxu0 0.0
      %743 = vmatprep.subr.mxu0 0.0
      %744 = vmatpush1.msra.mxu0 0.0
      %745 = vmatprep.subr.mxu0 0.0
      %746 = vmatpush1.msra.mxu0 0.0
      %747 = vmatprep.subr.mxu0 0.0
      %748 = vmatpush1.msra.mxu0 0.0
      %749 = vmatprep.subr.mxu0 0.0
      %750 = vmatpush1.msra.mxu0 0.0
      %751 = vmatprep.subr.mxu0 0.0
      %752 = vmatpush1.msra.mxu0 0.0
      %753 = vmatprep.subr.mxu0 0.0
      %754 = vmatpush1.msra.mxu0 0.0
      %755 = vmatprep.subr.mxu0 0.0
      %756 = vmatpush1.msra.mxu0 0.0
      %757 = vmatprep.subr.mxu0 0.0
      %758 = vmatpush1.msra.mxu0 0.0
      %759 = vmatprep.subr.mxu0 0.0
      %760 = vmatpush1.msra.mxu0 0.0
      %761 = vmatprep.subr.mxu0 0.0
      %762 = vmatpush1.msra.mxu0 0.0
      %763 = vmatprep.subr.mxu0 0.0
      %764 = vmatpush1.msra.mxu0 0.0
      %765 = vmatprep.subr.mxu0 0.0
      %766 = vmatpush1.msra.mxu0 0.0
      %767 = vmatprep.subr.mxu0 0.0
      %768 = vmatpush1.msra.mxu0 0.0
      %769 = vmatprep.subr.mxu0 0.0
      %770 = vmatpush1.msra.mxu0 0.0
      %771 = vmatprep.subr.mxu0 0.0
      %772 = vmatpush1.msra.mxu0 0.0
      %773 = vmatprep.subr.mxu0 0.0
      %774 = vmatpush1.msra.mxu0 0.0
      %775 = vmatprep.subr.mxu0 0.0
      %776 = vmatpush1.msra.mxu0 0.0
      %777 = vmatprep.subr.mxu0 0.0
      %778 = vmatpush1.msra.mxu0 0.0
      %779 = vmatprep.subr.mxu0 0.0
      %780 = vmatpush1.msra.mxu0 0.0
      %781 = vmatprep.subr.mxu0 0.0
      %782 = vmatpush1.msra.mxu0 0.0
      %783 = vmatprep.subr.mxu0 0.0
      %784 = vmatpush1.msra.mxu0 0.0
      %785 = vmatprep.subr.mxu0 0.0
      %786 = vmatpush1.msra.mxu0 0.0
      %787 = vmatprep.subr.mxu0 0.0
      %788 = vmatpush1.msra.mxu0 0.0
      %789 = vmatprep.subr.mxu0 0.0
      %790 = vmatpush1.msra.mxu0 0.0
      %791 = vmatprep.subr.mxu0 0.0
      %792 = vmatpush1.msra.mxu0 0.0
      %793 = vmatprep.subr.mxu0 0.0
      %794 = vmatpush1.msra.mxu0 0.0
      %795 = vmatprep.subr.mxu0 0.0
      %796 = vmatpush1.msra.mxu0 0.0
      %797 = vmatprep.mubr.f32.mxu0 0.0
      %798 = vmatmul.mubr.f32.gmra.mrb[0].mxu0 %v729
      %v799 = vpop.f32.mrb[0].mxu0
      %v800 = vadd.f32 0.0, %v799
      %v801 = vpop.f32.mrb[0].mxu0
      %802 = vmatprep.mubr.f32.mxu0 0.0
      %803 = vmatmul.mubr.f32.gmra.mrb[0].mxu0 %v731
      %v804 = vpop.f32.mrb[0].mxu0
      %v805 = vadd.f32 0.0, %v804
      %v806 = vpop.f32.mrb[0].mxu0
      %807 = vdwg.mxu0
      %v808 = vadd.f32 %v719, %v800
      %v809 = vadd.f32 %v720, %v805
      %s810 = scalar_lea.vmem %s3, 40
      %v811 = vld [vmem:[%s810] sm:$0xff]
      %v812 = vrot.slane %v633, 2
      %v813 = vrot.slane %v634, 2
      %v814 = vsel %vm546, %v812, %v813
      %v815 = vrot.slane %v635, 2
      %v816 = vsel %vm546, %v813, %v815
      %v817 = vsel %vm385, %v814, 0
      %v819 = vsel %vm385, %v816, 0
      %821 = vmatprep.subr.mxu0 0.0
      %822 = vmatpush1.msra.mxu0 %v811
      %823 = vmatprep.subr.mxu0 0.0
      %824 = vmatpush1.msra.mxu0 0.0
      %825 = vmatprep.subr.mxu0 0.0
      %826 = vmatpush1.msra.mxu0 0.0
      %827 = vmatprep.subr.mxu0 0.0
      %828 = vmatpush1.msra.mxu0 0.0
      %829 = vmatprep.subr.mxu0 0.0
      %830 = vmatpush1.msra.mxu0 0.0
      %831 = vmatprep.subr.mxu0 0.0
      %832 = vmatpush1.msra.mxu0 0.0
      %833 = vmatprep.subr.mxu0 0.0
      %834 = vmatpush1.msra.mxu0 0.0
      %835 = vmatprep.subr.mxu0 0.0
      %836 = vmatpush1.msra.mxu0 0.0
      %837 = vmatprep.subr.mxu0 0.0
      %838 = vmatpush1.msra.mxu0 0.0
      %839 = vmatprep.subr.mxu0 0.0
      %840 = vmatpush1.msra.mxu0 0.0
      %841 = vmatprep.subr.mxu0 0.0
      %842 = vmatpush1.msra.mxu0 0.0
      %843 = vmatprep.subr.mxu0 0.0
      %844 = vmatpush1.msra.mxu0 0.0
      %845 = vmatprep.subr.mxu0 0.0
      %846 = vmatpush1.msra.mxu0 0.0
      %847 = vmatprep.subr.mxu0 0.0
      %848 = vmatpush1.msra.mxu0 0.0
      %849 = vmatprep.subr.mxu0 0.0
      %850 = vmatpush1.msra.mxu0 0.0
      %851 = vmatprep.subr.mxu0 0.0
      %852 = vmatpush1.msra.mxu0 0.0
      %853 = vmatprep.subr.mxu0 0.0
      %854 = vmatpush1.msra.mxu0 0.0
      %855 = vmatprep.subr.mxu0 0.0
      %856 = vmatpush1.msra.mxu0 0.0
      %857 = vmatprep.subr.mxu0 0.0
      %858 = vmatpush1.msra.mxu0 0.0
      %859 = vmatprep.subr.mxu0 0.0
      %860 = vmatpush1.msra.mxu0 0.0
      %861 = vmatprep.subr.mxu0 0.0
      %862 = vmatpush1.msra.mxu0 0.0
      %863 = vmatprep.subr.mxu0 0.0
      %864 = vmatpush1.msra.mxu0 0.0
      %865 = vmatprep.subr.mxu0 0.0
      %866 = vmatpush1.msra.mxu0 0.0
      %867 = vmatprep.subr.mxu0 0.0
      %868 = vmatpush1.msra.mxu0 0.0
      %869 = vmatprep.subr.mxu0 0.0
      %870 = vmatpush1.msra.mxu0 0.0
      %871 = vmatprep.subr.mxu0 0.0
      %872 = vmatpush1.msra.mxu0 0.0
      %873 = vmatprep.subr.mxu0 0.0
      %874 = vmatpush1.msra.mxu0 0.0
      %875 = vmatprep.subr.mxu0 0.0
      %876 = vmatpush1.msra.mxu0 0.0
      %877 = vmatprep.subr.mxu0 0.0
      %878 = vmatpush1.msra.mxu0 0.0
      %879 = vmatprep.subr.mxu0 0.0
      %880 = vmatpush1.msra.mxu0 0.0
      %881 = vmatprep.subr.mxu0 0.0
      %882 = vmatpush1.msra.mxu0 0.0
      %883 = vmatprep.subr.mxu0 0.0
      %884 = vmatpush1.msra.mxu0 0.0
      %885 = vmatprep.mubr.f32.mxu0 0.0
      %886 = vmatmul.mubr.f32.gmra.mrb[0].mxu0 %v817
      %v887 = vpop.f32.mrb[0].mxu0
      %v888 = vadd.f32 0.0, %v887
      %v889 = vpop.f32.mrb[0].mxu0
      %890 = vmatprep.mubr.f32.mxu0 0.0
      %891 = vmatmul.mubr.f32.gmra.mrb[0].mxu0 %v819
      %v892 = vpop.f32.mrb[0].mxu0
      %v893 = vadd.f32 0.0, %v892
      %v894 = vpop.f32.mrb[0].mxu0
      %895 = vdwg.mxu0
      %v896 = vadd.f32 %v808, %v888
      %v897 = vadd.f32 %v809, %v893
      %v898 = vld [vmem:[%s359] sm:$0xff]
      %v899 = vld [vmem:[%s359 + $0x8] sm:$0xff]
      %v900 = vld [vmem:[%s359 + $0x10] sm:$0x3]
      %s901 = scalar_lea.vmem %s3, 48
      %v902 = vld [vmem:[%s901] sm:$0xff]
      %v904 = vsel %vm385, %v898, 0
      %v907 = vsel %vm385, %v899, 0
      %909 = vmatprep.subr.mxu0 0.0
      %910 = vmatpush1.msra.mxu0 %v902
      %911 = vmatprep.subr.mxu0 0.0
      %912 = vmatpush1.msra.mxu0 0.0
      %913 = vmatprep.subr.mxu0 0.0
      %914 = vmatpush1.msra.mxu0 0.0
      %915 = vmatprep.subr.mxu0 0.0
      %916 = vmatpush1.msra.mxu0 0.0
      %917 = vmatprep.subr.mxu0 0.0
      %918 = vmatpush1.msra.mxu0 0.0
      %919 = vmatprep.subr.mxu0 0.0
      %920 = vmatpush1.msra.mxu0 0.0
      %921 = vmatprep.subr.mxu0 0.0
      %922 = vmatpush1.msra.mxu0 0.0
      %923 = vmatprep.subr.mxu0 0.0
      %924 = vmatpush1.msra.mxu0 0.0
      %925 = vmatprep.subr.mxu0 0.0
      %926 = vmatpush1.msra.mxu0 0.0
      %927 = vmatprep.subr.mxu0 0.0
      %928 = vmatpush1.msra.mxu0 0.0
      %929 = vmatprep.subr.mxu0 0.0
      %930 = vmatpush1.msra.mxu0 0.0
      %931 = vmatprep.subr.mxu0 0.0
      %932 = vmatpush1.msra.mxu0 0.0
      %933 = vmatprep.subr.mxu0 0.0
      %934 = vmatpush1.msra.mxu0 0.0
      %935 = vmatprep.subr.mxu0 0.0
      %936 = vmatpush1.msra.mxu0 0.0
      %937 = vmatprep.subr.mxu0 0.0
      %938 = vmatpush1.msra.mxu0 0.0
      %939 = vmatprep.subr.mxu0 0.0
      %940 = vmatpush1.msra.mxu0 0.0
      %941 = vmatprep.subr.mxu0 0.0
      %942 = vmatpush1.msra.mxu0 0.0
      %943 = vmatprep.subr.mxu0 0.0
      %944 = vmatpush1.msra.mxu0 0.0
      %945 = vmatprep.subr.mxu0 0.0
      %946 = vmatpush1.msra.mxu0 0.0
      %947 = vmatprep.subr.mxu0 0.0
      %948 = vmatpush1.msra.mxu0 0.0
      %949 = vmatprep.subr.mxu0 0.0
      %950 = vmatpush1.msra.mxu0 0.0
      %951 = vmatprep.subr.mxu0 0.0
      %952 = vmatpush1.msra.mxu0 0.0
      %953 = vmatprep.subr.mxu0 0.0
      %954 = vmatpush1.msra.mxu0 0.0
      %955 = vmatprep.subr.mxu0 0.0
      %956 = vmatpush1.msra.mxu0 0.0
      %957 = vmatprep.subr.mxu0 0.0
      %958 = vmatpush1.msra.mxu0 0.0
      %959 = vmatprep.subr.mxu0 0.0
      %960 = vmatpush1.msra.mxu0 0.0
      %961 = vmatprep.subr.mxu0 0.0
      %962 = vmatpush1.msra.mxu0 0.0
      %963 = vmatprep.subr.mxu0 0.0
      %964 = vmatpush1.msra.mxu0 0.0
      %965 = vmatprep.subr.mxu0 0.0
      %966 = vmatpush1.msra.mxu0 0.0
      %967 = vmatprep.subr.mxu0 0.0
      %968 = vmatpush1.msra.mxu0 0.0
      %969 = vmatprep.subr.mxu0 0.0
      %970 = vmatpush1.msra.mxu0 0.0
      %971 = vmatprep.subr.mxu0 0.0
      %972 = vmatpush1.msra.mxu0 0.0
      %973 = vmatprep.mubr.f32.mxu0 0.0
      %974 = vmatmul.mubr.f32.gmra.mrb[0].mxu0 %v904
      %v975 = vpop.f32.mrb[0].mxu0
      %v976 = vadd.f32 0.0, %v975
      %v977 = vpop.f32.mrb[0].mxu0
      %978 = vmatprep.mubr.f32.mxu0 0.0
      %979 = vmatmul.mubr.f32.gmra.mrb[0].mxu0 %v907
      %v980 = vpop.f32.mrb[0].mxu0
      %v981 = vadd.f32 0.0, %v980
      %v982 = vpop.f32.mrb[0].mxu0
      %983 = vdwg.mxu0
      %v984 = vadd.f32 %v896, %v976
      %v985 = vadd.f32 %v897, %v981
      %s986 = scalar_lea.vmem %s3, 56
      %v987 = vld [vmem:[%s986] sm:$0xff]
      %v989 = vrot.slane %v898, 1
      %v990 = vrot.slane %v899, 1
      %v991 = vsel %vm379, %v989, %v990
      %v992 = vrot.slane %v900, 1
      %v993 = vsel %vm379, %v990, %v992
      %v994 = vsel %vm385, %v991, 0
      %v996 = vsel %vm385, %v993, 0
      %998 = vmatprep.subr.mxu0 0.0
      %999 = vmatpush1.msra.mxu0 %v987
      %1000 = vmatprep.subr.mxu0 0.0
      %1001 = vmatpush1.msra.mxu0 0.0
      %1002 = vmatprep.subr.mxu0 0.0
      %1003 = vmatpush1.msra.mxu0 0.0
      %1004 = vmatprep.subr.mxu0 0.0
      %1005 = vmatpush1.msra.mxu0 0.0
      %1006 = vmatprep.subr.mxu0 0.0
      %1007 = vmatpush1.msra.mxu0 0.0
      %1008 = vmatprep.subr.mxu0 0.0
      %1009 = vmatpush1.msra.mxu0 0.0
      %1010 = vmatprep.subr.mxu0 0.0
      %1011 = vmatpush1.msra.mxu0 0.0
      %1012 = vmatprep.subr.mxu0 0.0
      %1013 = vmatpush1.msra.mxu0 0.0
      %1014 = vmatprep.subr.mxu0 0.0
      %1015 = vmatpush1.msra.mxu0 0.0
      %1016 = vmatprep.subr.mxu0 0.0
      %1017 = vmatpush1.msra.mxu0 0.0
      %1018 = vmatprep.subr.mxu0 0.0
      %1019 = vmatpush1.msra.mxu0 0.0
      %1020 = vmatprep.subr.mxu0 0.0
      %1021 = vmatpush1.msra.mxu0 0.0
      %1022 = vmatprep.subr.mxu0 0.0
      %1023 = vmatpush1.msra.mxu0 0.0
      %1024 = vmatprep.subr.mxu0 0.0
      %1025 = vmatpush1.msra.mxu0 0.0
      %1026 = vmatprep.subr.mxu0 0.0
      %1027 = vmatpush1.msra.mxu0 0.0
      %1028 = vmatprep.subr.mxu0 0.0
      %1029 = vmatpush1.msra.mxu0 0.0
      %1030 = vmatprep.subr.mxu0 0.0
      %1031 = vmatpush1.msra.mxu0 0.0
      %1032 = vmatprep.subr.mxu0 0.0
      %1033 = vmatpush1.msra.mxu0 0.0
      %1034 = vmatprep.subr.mxu0 0.0
      %1035 = vmatpush1.msra.mxu0 0.0
      %1036 = vmatprep.subr.mxu0 0.0
      %1037 = vmatpush1.msra.mxu0 0.0
      %1038 = vmatprep.subr.mxu0 0.0
      %1039 = vmatpush1.msra.mxu0 0.0
      %1040 = vmatprep.subr.mxu0 0.0
      %1041 = vmatpush1.msra.mxu0 0.0
      %1042 = vmatprep.subr.mxu0 0.0
      %1043 = vmatpush1.msra.mxu0 0.0
      %1044 = vmatprep.subr.mxu0 0.0
      %1045 = vmatpush1.msra.mxu0 0.0
      %1046 = vmatprep.subr.mxu0 0.0
      %1047 = vmatpush1.msra.mxu0 0.0
      %1048 = vmatprep.subr.mxu0 0.0
      %1049 = vmatpush1.msra.mxu0 0.0
      %1050 = vmatprep.subr.mxu0 0.0
      %1051 = vmatpush1.msra.mxu0 0.0
      %1052 = vmatprep.subr.mxu0 0.0
      %1053 = vmatpush1.msra.mxu0 0.0
      %1054 = vmatprep.subr.mxu0 0.0
      %1055 = vmatpush1.msra.mxu0 0.0
      %1056 = vmatprep.subr.mxu0 0.0
      %1057 = vmatpush1.msra.mxu0 0.0
      %1058 = vmatprep.subr.mxu0 0.0
      %1059 = vmatpush1.msra.mxu0 0.0
      %1060 = vmatprep.subr.mxu0 0.0
      %1061 = vmatpush1.msra.mxu0 0.0
      %1062 = vmatprep.mubr.f32.mxu0 0.0
      %1063 = vmatmul.mubr.f32.gmra.mrb[0].mxu0 %v994
      %v1064 = vpop.f32.mrb[0].mxu0
      %v1065 = vadd.f32 0.0, %v1064
      %v1066 = vpop.f32.mrb[0].mxu0
      %1067 = vmatprep.mubr.f32.mxu0 0.0
      %1068 = vmatmul.mubr.f32.gmra.mrb[0].mxu0 %v996
      %v1069 = vpop.f32.mrb[0].mxu0
      %v1070 = vadd.f32 0.0, %v1069
      %v1071 = vpop.f32.mrb[0].mxu0
      %1072 = vdwg.mxu0
      %v1073 = vadd.f32 %v984, %v1065
      %v1074 = vadd.f32 %v985, %v1070
      %s1075 = scalar_lea.vmem %s3, 64
      %v1076 = vld [vmem:[%s1075] sm:$0xff]
      %v1077 = vrot.slane %v898, 2
      %v1078 = vrot.slane %v899, 2
      %v1079 = vsel %vm546, %v1077, %v1078
      %v1080 = vrot.slane %v900, 2
      %v1081 = vsel %vm546, %v1078, %v1080
      %v1082 = vsel %vm385, %v1079, 0
      %v1084 = vsel %vm385, %v1081, 0
      %1086 = vmatprep.subr.mxu0 0.0
      %1087 = vmatpush1.msra.mxu0 %v1076
      %1088 = vmatprep.subr.mxu0 0.0
      %1089 = vmatpush1.msra.mxu0 0.0
      %1090 = vmatprep.subr.mxu0 0.0
      %1091 = vmatpush1.msra.mxu0 0.0
      %1092 = vmatprep.subr.mxu0 0.0
      %1093 = vmatpush1.msra.mxu0 0.0
      %1094 = vmatprep.subr.mxu0 0.0
      %1095 = vmatpush1.msra.mxu0 0.0
      %1096 = vmatprep.subr.mxu0 0.0
      %1097 = vmatpush1.msra.mxu0 0.0
      %1098 = vmatprep.subr.mxu0 0.0
      %1099 = vmatpush1.msra.mxu0 0.0
      %1100 = vmatprep.subr.mxu0 0.0
      %1101 = vmatpush1.msra.mxu0 0.0
      %1102 = vmatprep.subr.mxu0 0.0
      %1103 = vmatpush1.msra.mxu0 0.0
      %1104 = vmatprep.subr.mxu0 0.0
      %1105 = vmatpush1.msra.mxu0 0.0
      %1106 = vmatprep.subr.mxu0 0.0
      %1107 = vmatpush1.msra.mxu0 0.0
      %1108 = vmatprep.subr.mxu0 0.0
      %1109 = vmatpush1.msra.mxu0 0.0
      %1110 = vmatprep.subr.mxu0 0.0
      %1111 = vmatpush1.msra.mxu0 0.0
      %1112 = vmatprep.subr.mxu0 0.0
      %1113 = vmatpush1.msra.mxu0 0.0
      %1114 = vmatprep.subr.mxu0 0.0
      %1115 = vmatpush1.msra.mxu0 0.0
      %1116 = vmatprep.subr.mxu0 0.0
      %1117 = vmatpush1.msra.mxu0 0.0
      %1118 = vmatprep.subr.mxu0 0.0
      %1119 = vmatpush1.msra.mxu0 0.0
      %1120 = vmatprep.subr.mxu0 0.0
      %1121 = vmatpush1.msra.mxu0 0.0
      %1122 = vmatprep.subr.mxu0 0.0
      %1123 = vmatpush1.msra.mxu0 0.0
      %1124 = vmatprep.subr.mxu0 0.0
      %1125 = vmatpush1.msra.mxu0 0.0
      %1126 = vmatprep.subr.mxu0 0.0
      %1127 = vmatpush1.msra.mxu0 0.0
      %1128 = vmatprep.subr.mxu0 0.0
      %1129 = vmatpush1.msra.mxu0 0.0
      %1130 = vmatprep.subr.mxu0 0.0
      %1131 = vmatpush1.msra.mxu0 0.0
      %1132 = vmatprep.subr.mxu0 0.0
      %1133 = vmatpush1.msra.mxu0 0.0
      %1134 = vmatprep.subr.mxu0 0.0
      %1135 = vmatpush1.msra.mxu0 0.0
      %1136 = vmatprep.subr.mxu0 0.0
      %1137 = vmatpush1.msra.mxu0 0.0
      %1138 = vmatprep.subr.mxu0 0.0
      %1139 = vmatpush1.msra.mxu0 0.0
      %1140 = vmatprep.subr.mxu0 0.0
      %1141 = vmatpush1.msra.mxu0 0.0
      %1142 = vmatprep.subr.mxu0 0.0
      %1143 = vmatpush1.msra.mxu0 0.0
      %1144 = vmatprep.subr.mxu0 0.0
      %1145 = vmatpush1.msra.mxu0 0.0
      %1146 = vmatprep.subr.mxu0 0.0
      %1147 = vmatpush1.msra.mxu0 0.0
      %1148 = vmatprep.subr.mxu0 0.0
      %1149 = vmatpush1.msra.mxu0 0.0
      %1150 = vmatprep.mubr.f32.mxu0 0.0
      %1151 = vmatmul.mubr.f32.gmra.mrb[0].mxu0 %v1082
      %v1152 = vpop.f32.mrb[0].mxu0
      %v1153 = vadd.f32 0.0, %v1152
      %v1154 = vpop.f32.mrb[0].mxu0
      %1155 = vmatprep.mubr.f32.mxu0 0.0
      %1156 = vmatmul.mubr.f32.gmra.mrb[0].mxu0 %v1084
      %v1157 = vpop.f32.mrb[0].mxu0
      %v1158 = vadd.f32 0.0, %v1157
      %v1159 = vpop.f32.mrb[0].mxu0
      %1160 = vdwg.mxu0
      %v1161 = vadd.f32 %v1073, %v1153
      %v1162 = vadd.f32 %v1074, %v1158
      %v1163 = vld [vmem:[%s4] sm:$0x1]
      %v1165 = vlaneseq
      %v1166 = vshrl.u32 %v1165, 7
      %v1167 = vsub.s32 0, %v1166
      %v1168 = vrot.slane %v1163, %v1167
      %v1170 = vmul.f32 %v1161, %v1168
      %v1171 = vmul.f32 %v1162, %v1168
      %v1172 = vld [vmem:[%s5] sm:$0x1]
      %v1174 = vlaneseq
      %v1175 = vshrl.u32 %v1174, 7
      %v1176 = vsub.s32 0, %v1175
      %v1177 = vrot.slane %v1172, %v1176
      %v1179 = vadd.f32 %v1170, %v1177
      %v1180 = vadd.f32 %v1171, %v1177
      %vm1181 = vcmp.ge.f32.partialorder %v1179, 0.0
      %vm1182 = vcmp.ge.f32.partialorder %v1180, 0.0
      %v1183 = vmul.f32 %v1179, 0.01
      %v1184 = vmul.f32 %v1180, 0.01
      %v1185 = vsel %vm1181, %v1179, %v1183
      %v1186 = vsel %vm1182, %v1180, %v1184
      %1187 = vst [vmem:[%s369] sm:$0xff] %v1185
      %1188 = vst [vmem:[%s369 + $0x8] sm:$0xff] %v1186
      %p1189 = scmp.lt.s32.totalorder %s21, 1
      %s1190 = scalar_select %p1189, %s21, 1
      %p1191 = scmp.lt.s32.totalorder %s22, 15
      %s1192 = scalar_select %p1191, %s22, 15
      %s1193 = smul.addr %s1192, 2
      %s1194 = smul.addr %s1190, 32
      %s1195 = sadd.s32 %s1193, %s1194
      %s1196 = smul.addr %s1195, 8
      %s1197 = scalar_lea.vmem %s6, %s1196
      // Predicated region
      $region45: #{conv_forward.3} parent=43 // pred_check
        %p1198 = pneg %p200
      $region46: #{conv_forward.3} parent=43 // pred_check_branch
        %1200 = sbr.rel (%p1198) target = $region48
      $region47: #{conv_forward.3} parent=43 // pred_region
        _
      $region48: #{conv_forward.3} parent=43 // pred_fallthru
        _
    $region44: #{conv_forward.3} parent=5 // pred_fallthru
      _
    %p1201 = scmp.le.s32.totalorder 2, %s12
    // Predicated region
    $region49: #{conv_forward.3} parent=5 // pred_check
      %p1202 = pneg %p1201
    $region50: #{conv_forward.3} parent=5 // pred_check_branch
      %1204 = sbr.rel (%p1202) target = $region52
    $region51: #{conv_forward.3} parent=5 // pred_region
      %s1205 = ssub.s32 %s12, 2
      // Predicated region
      $region53: #{conv_forward.3} parent=51 // pred_check
        %p1206 = pneg %p206
      $region54: #{conv_forward.3} parent=51 // pred_check_branch
        %1208 = sbr.rel (%p1206) target = $region56
      $region55: #{conv_forward.3} parent=51 // pred_region
        %p1209 = scmp.lt.s32.totalorder %s23, 1
        %s1210 = scalar_select %p1209, %s23, 1
        %p1211 = scmp.lt.s32.totalorder %s24, 15
        %s1212 = scalar_select %p1211, %s24, 15
        %s1213 = smul.addr %s1212, 2
        %s1214 = smul.addr %s1210, 32
        %s1215 = sadd.s32 %s1213, %s1214
        %s1216 = smul.addr %s1215, 8
        %s1217 = scalar_lea.vmem %s6, %s1216
      $region56: #{conv_forward.3} parent=51 // pred_fallthru
        _
    $region52: #{conv_forward.3} parent=5 // pred_fallthru
      _
  $region6: #{conv_forward.3} parent=0 // loop_footer
    %s16 = sadd.s32 1, %s12
  $region7: #{conv_forward.3} parent=0 // loop_footer_branch
    %11 = sbr.rel target = $region3
  $region8: #{conv_forward.3} parent=0 // loop_exit
    _

</llo_original>
